<compile_context>
chip_gen: v7x
topology: tpu7x:2x2x1
jax: 0.10.0
libtpu: 0.0.40
codegen_flags: <defaults>
</compile_context>

<pallas_src>
import functools

import jax
import jax.numpy as jnp
from jax.experimental import pallas as pl
from jax.experimental.pallas import tpu as pltpu

LN_EPS = 1e-5  # PyTorch nn.LayerNorm default


def _transformer_block_kernel(x_ref,
                              ln1g_ref, ln1b_ref,
                              wqkv_ref, bqkv_ref,
                              wproj_ref, bproj_ref,
                              ln2g_ref, ln2b_ref,
                              wff1_ref, bff1_ref,
                              wff2_ref, bff2_ref,
                              o_ref,
                              heads_ref,
                              *, num_heads, emb_size):
    E = emb_size
    H = num_heads
    D = E // H

    x = x_ref[...].astype(jnp.float32)                       # (N, E)

    def layer_norm(v, g_ref, b_ref):
        mu = jnp.mean(v, axis=-1, keepdims=True)
        var = jnp.mean((v - mu) ** 2, axis=-1, keepdims=True)
        return (v - mu) * jax.lax.rsqrt(var + LN_EPS) * g_ref[...] + b_ref[...]

    # ---------------- attention branch ----------------
    xn = layer_norm(x, ln1g_ref, ln1b_ref)                   # (N, E)  f32
    qkv = jnp.dot(xn.astype(jnp.bfloat16), wqkv_ref[...],
                  preferred_element_type=jnp.float32) + bqkv_ref[...]   # (N, 3E)
    q = qkv[:, 0:E]
    k = qkv[:, E:2 * E]
    v = qkv[:, 2 * E:3 * E]

    inv_scale = 1.0 / (float(E) ** 0.5)   # torch scales by emb_size ** 0.5

    for h in range(H):                     # static unrolled per-head loop
        sl = slice(h * D, (h + 1) * D)
        q_h = q[:, sl].astype(jnp.bfloat16)                  # (N, D)
        k_h = k[:, sl].astype(jnp.bfloat16)                  # (N, D)
        v_h = v[:, sl].astype(jnp.bfloat16)                  # (N, D)
        # energy = q_h @ k_h^T, contracted on the head dim
        energy = jax.lax.dot_general(
            q_h, k_h, (((1,), (1,)), ((), ())),
            preferred_element_type=jnp.float32)              # (N, N) f32
        energy = energy * inv_scale
        energy = energy - jnp.max(energy, axis=-1, keepdims=True)
        p = jnp.exp(energy)
        denom = jnp.sum(p, axis=-1, keepdims=True)
        att = p * pl.reciprocal(denom, approx=True)          # softmax, f32
        o_h = jnp.dot(att.astype(jnp.bfloat16), v_h,
                      preferred_element_type=jnp.float32)    # (N, D)
        heads_ref[:, sl] = o_h                               # 'b h n d -> b n (h d)'

    attn = jnp.dot(heads_ref[...].astype(jnp.bfloat16), wproj_ref[...],
                   preferred_element_type=jnp.float32) + bproj_ref[...]
    x1 = x + attn                                            # residual 1

    # ---------------- feed-forward branch ----------------
    yn = layer_norm(x1, ln2g_ref, ln2b_ref)
    h1 = jnp.dot(yn.astype(jnp.bfloat16), wff1_ref[...],
                 preferred_element_type=jnp.float32) + bff1_ref[...]    # (N, 4E)
    # GELU (tanh approximation; see TODO at top of file)
    c = 0.7978845608028654  # sqrt(2/pi)
    h1 = 0.5 * h1 * (1.0 + jnp.tanh(c * (h1 + 0.044715 * h1 * h1 * h1)))
    ff = jnp.dot(h1.astype(jnp.bfloat16), wff2_ref[...],
                 preferred_element_type=jnp.float32) + bff2_ref[...]    # (N, E)

    o_ref[...] = (x1 + ff).astype(o_ref.dtype)               # residual 2


def transformer_block_forward(x, params, num_heads):
    """x: (B, N, E) float32."""
    B, N, E = x.shape
    H = num_heads
    D = E // H
    F_hidden = params["w_ff1"].shape[1]

    # ---- one-time glue on tiny params (constant-folded under jit) ----
    # Reorder QKV columns from einops '(h d qkv)' (qkv fastest) to [q | k | v]
    # contiguous blocks (each ordered h-major, d-minor), so the kernel uses
    # contiguous static slices.
    w_qkv = params["w_qkv"].reshape(E, H, D, 3)
    w_qkv = jnp.transpose(w_qkv, (0, 3, 1, 2)).reshape(E, 3 * E)
    b_qkv = params["b_qkv"].reshape(H, D, 3)
    b_qkv = jnp.transpose(b_qkv, (2, 0, 1)).reshape(1, 3 * E)

    # bf16 MXU operands (weights cast once; biases / LN params stay f32).
    w_qkv = w_qkv.astype(jnp.bfloat16)
    w_proj = params["w_proj"].astype(jnp.bfloat16)
    w_ff1 = params["w_ff1"].astype(jnp.bfloat16)
    w_ff2 = params["w_ff2"].astype(jnp.bfloat16)

    kernel = functools.partial(_transformer_block_kernel,
                               num_heads=H, emb_size=E)

    def const(shape):
        return pl.BlockSpec(shape, lambda b: (0, 0))

    grid_spec = pltpu.PrefetchScalarGridSpec(
        num_scalar_prefetch=0,
        grid=(B,),
        in_specs=[
            pl.BlockSpec((None, N, E), lambda b: (b, 0, 0)),   # x (leading dim squeezed)
            const((1, E)), const((1, E)),                      # ln1 gamma/beta
            const((E, 3 * E)), const((1, 3 * E)),              # qkv W/b
            const((E, E)), const((1, E)),                      # proj W/b
            const((1, E)), const((1, E)),                      # ln2 gamma/beta
            const((E, F_hidden)), const((1, F_hidden)),        # ff1 W/b
            const((F_hidden, E)), const((1, E)),               # ff2 W/b
        ],
        out_specs=pl.BlockSpec((None, N, E), lambda b: (b, 0, 0)),
        scratch_shapes=[pltpu.VMEM((N, E), jnp.float32)],      # per-head outputs
    )

    return pl.pallas_call(
        kernel,
        out_shape=jax.ShapeDtypeStruct((B, N, E), x.dtype),
        grid_spec=grid_spec,
        compiler_params=pltpu.CompilerParams(
            dimension_semantics=("parallel",),
            vmem_limit_bytes=64 * 1024 * 1024),
    )(x,
      params["ln1_g"], params["ln1_b"],
      w_qkv, b_qkv,
      w_proj, params["b_proj"],
      params["ln2_g"], params["ln2_b"],
      w_ff1, params["b_ff1"],
      w_ff2, params["b_ff2"])


def init_params(key, emb_size, expansion, num_heads):
    hidden = expansion * emb_size
    ks = jax.random.split(key, 12)

    def linear_init(kw, kb, fan_in, fan_out):
        bound = 1.0 / (fan_in ** 0.5)        # PyTorch nn.Linear default
        w = jax.random.uniform(kw, (fan_in, fan_out), jnp.float32, -bound, bound)
        b = jax.random.uniform(kb, (1, fan_out), jnp.float32, -bound, bound)
        return w, b

    w_qkv, b_qkv = linear_init(ks[0], ks[1], emb_size, 3 * emb_size)
    w_proj, b_proj = linear_init(ks[2], ks[3], emb_size, emb_size)
    w_ff1, b_ff1 = linear_init(ks[4], ks[5], emb_size, hidden)
    w_ff2, b_ff2 = linear_init(ks[6], ks[7], hidden, emb_size)

    # Slightly randomized LN affine so the affine path is actually exercised.
    return {
        "ln1_g": 1.0 + 0.1 * jax.random.normal(ks[8], (1, emb_size), jnp.float32),
        "ln1_b": 0.1 * jax.random.normal(ks[9], (1, emb_size), jnp.float32),
        "ln2_g": 1.0 + 0.1 * jax.random.normal(ks[10], (1, emb_size), jnp.float32),
        "ln2_b": 0.1 * jax.random.normal(ks[11], (1, emb_size), jnp.float32),
        "w_qkv": w_qkv, "b_qkv": b_qkv,
        "w_proj": w_proj, "b_proj": b_proj,
        "w_ff1": w_ff1, "b_ff1": b_ff1,
        "w_ff2": w_ff2, "b_ff2": b_ff2,
    }


def _reference(x, params, num_heads):
    """Pure-JAX f32 reference matching the PyTorch module exactly."""
    B, N, E = x.shape
    H = num_heads
    D = E // H

    def ln(v, g, b):
        mu = jnp.mean(v, axis=-1, keepdims=True)
        var = jnp.mean((v - mu) ** 2, axis=-1, keepdims=True)
        return (v - mu) * jax.lax.rsqrt(var + LN_EPS) * g + b

    # attention branch
    xn = ln(x, params["ln1_g"], params["ln1_b"])
    qkv = xn @ params["w_qkv"] + params["b_qkv"]             # (B, N, 3E)
    qkv = qkv.reshape(B, N, H, D, 3)                         # '(h d qkv)'
    qkv = jnp.transpose(qkv, (4, 0, 2, 1, 3))                # (3, B, H, N, D)
    q, k, v = qkv[0], qkv[1], qkv[2]
    energy = jnp.einsum("bhqd,bhkd->bhqk", q, k)
    att = jax.nn.softmax(energy / (E ** 0.5), axis=-1)
    out = jnp.einsum("bhal,bhlv->bhav", att, v)
    out = jnp.transpose(out, (0, 2, 1, 3)).reshape(B, N, E)  # 'b h n d -> b n (h d)'
    out = out @ params["w_proj"] + params["b_proj"]
    x1 = x + out

    # feed-forward branch (exact erf GELU, like nn.GELU())
    yn = ln(x1, params["ln2_g"], params["ln2_b"])
    h1 = yn @ params["w_ff1"] + params["b_ff1"]
    h1 = 0.5 * h1 * (1.0 + jax.lax.erf(h1 / jnp.sqrt(2.0)))
    out2 = h1 @ params["w_ff2"] + params["b_ff2"]
    return x1 + out2


if __name__ == "__main__":
    # small shapes: batch=2, seq=8, emb=32, heads=4 (head_dim=8), expansion=4
    B, N, E, HEADS, EXP = 2, 8, 32, 4, 4

    key = jax.random.PRNGKey(0)
    kx, kp = jax.random.split(key)
    x = jax.random.normal(kx, (B, N, E), jnp.float32)
    params = init_params(kp, E, EXP, HEADS)

    out = transformer_block_forward(x, params, HEADS)
    out = jax.block_until_ready(out)

    ref = _reference(x, params, HEADS)
    assert out.shape == (B, N, E), out.shape
    max_err = float(jnp.max(jnp.abs(out - ref)))
    # bf16 MXU operands + tanh-GELU vs exact f32 reference => loosened tolerance
    assert jnp.allclose(out, ref, atol=3e-2, rtol=3e-2), max_err

    print("KERNEL_OK")
</pallas_src>

<mosaic_0001>
module attributes {stable_mosaic.version = 11 : i64} {
  func.func @_transformer_block_kernel(%arg0: i32, %arg1: memref<1x8x32xf32, #tpu.memory_space<vmem>>, %arg2: memref<1x32xf32, #tpu.memory_space<vmem>>, %arg3: memref<1x32xf32, #tpu.memory_space<vmem>>, %arg4: memref<32x96xbf16, #tpu.memory_space<vmem>>, %arg5: memref<1x96xf32, #tpu.memory_space<vmem>>, %arg6: memref<32x32xbf16, #tpu.memory_space<vmem>>, %arg7: memref<1x32xf32, #tpu.memory_space<vmem>>, %arg8: memref<1x32xf32, #tpu.memory_space<vmem>>, %arg9: memref<1x32xf32, #tpu.memory_space<vmem>>, %arg10: memref<32x128xbf16, #tpu.memory_space<vmem>>, %arg11: memref<1x128xf32, #tpu.memory_space<vmem>>, %arg12: memref<128x32xbf16, #tpu.memory_space<vmem>>, %arg13: memref<1x32xf32, #tpu.memory_space<vmem>>, %arg14: memref<1x8x32xf32, #tpu.memory_space<vmem>>, %arg15: memref<8x32xf32, #tpu.memory_space<vmem>>) attributes {dimension_semantics = [#tpu.dimension_semantics<parallel>], iteration_bounds = array<i64: 2>, scalar_prefetch = 0 : i64, scratch_operands = 1 : i64, tpu.core_type = #tpu.core_type<tc>, window_params = [{transform_indices = @transform_0, window_bounds = array<i64: 1, 8, 32>}, {pipeline_mode = #tpu.pipeline_mode<synchronous>, transform_indices = @transform_1, window_bounds = array<i64: 1, 32>}, {pipeline_mode = #tpu.pipeline_mode<synchronous>, transform_indices = @transform_2, window_bounds = array<i64: 1, 32>}, {pipeline_mode = #tpu.pipeline_mode<synchronous>, transform_indices = @transform_3, window_bounds = array<i64: 32, 96>}, {pipeline_mode = #tpu.pipeline_mode<synchronous>, transform_indices = @transform_4, window_bounds = array<i64: 1, 96>}, {pipeline_mode = #tpu.pipeline_mode<synchronous>, transform_indices = @transform_5, window_bounds = array<i64: 32, 32>}, {pipeline_mode = #tpu.pipeline_mode<synchronous>, transform_indices = @transform_6, window_bounds = array<i64: 1, 32>}, {pipeline_mode = #tpu.pipeline_mode<synchronous>, transform_indices = @transform_7, window_bounds = array<i64: 1, 32>}, {pipeline_mode = #tpu.pipeline_mode<synchronous>, transform_indices = @transform_8, window_bounds = array<i64: 1, 32>}, {pipeline_mode = #tpu.pipeline_mode<synchronous>, transform_indices = @transform_9, window_bounds = array<i64: 32, 128>}, {pipeline_mode = #tpu.pipeline_mode<synchronous>, transform_indices = @transform_10, window_bounds = array<i64: 1, 128>}, {pipeline_mode = #tpu.pipeline_mode<synchronous>, transform_indices = @transform_11, window_bounds = array<i64: 128, 32>}, {pipeline_mode = #tpu.pipeline_mode<synchronous>, transform_indices = @transform_12, window_bounds = array<i64: 1, 32>}, {transform_indices = @transform_13, window_bounds = array<i64: 1, 8, 32>}]} {
    %c0 = arith.constant 0 : index
    %c0_0 = arith.constant 0 : index
    %c0_1 = arith.constant 0 : index
    %0 = vector.load %arg1[%c0, %c0_0, %c0_1] : memref<1x8x32xf32, #tpu.memory_space<vmem>>, vector<1x8x32xf32>
    %1 = vector.shape_cast %0 : vector<1x8x32xf32> to vector<8x32xf32>
    %cst = arith.constant dense<0.000000e+00> : vector<8xf32>
    %2 = vector.multi_reduction <add>, %1, %cst [1] : vector<8x32xf32> to vector<8xf32>
    %3 = vector.shape_cast %2 : vector<8xf32> to vector<8x1xf32>
    %cst_2 = arith.constant 3.200000e+01 : f32
    %4 = vector.broadcast %cst_2 : f32 to vector<8x1xf32>
    %5 = arith.divf %3, %4 : vector<8x1xf32>
    %6 = vector.broadcast %5 : vector<8x1xf32> to vector<8x32xf32>
    %7 = arith.subf %1, %6 : vector<8x32xf32>
    %8 = arith.mulf %7, %7 : vector<8x32xf32>
    %cst_3 = arith.constant dense<0.000000e+00> : vector<8xf32>
    %9 = vector.multi_reduction <add>, %8, %cst_3 [1] : vector<8x32xf32> to vector<8xf32>
    %10 = vector.shape_cast %9 : vector<8xf32> to vector<8x1xf32>
    %cst_4 = arith.constant 3.200000e+01 : f32
    %11 = vector.broadcast %cst_4 : f32 to vector<8x1xf32>
    %12 = arith.divf %10, %11 : vector<8x1xf32>
    %13 = vector.broadcast %5 : vector<8x1xf32> to vector<8x32xf32>
    %14 = arith.subf %1, %13 : vector<8x32xf32>
    %cst_5 = arith.constant 9.99999974E-6 : f32
    %15 = vector.broadcast %cst_5 : f32 to vector<8x1xf32>
    %16 = arith.addf %12, %15 : vector<8x1xf32>
    %17 = math.rsqrt %16 : vector<8x1xf32>
    %18 = vector.broadcast %17 : vector<8x1xf32> to vector<8x32xf32>
    %19 = arith.mulf %14, %18 : vector<8x32xf32>
    %c0_6 = arith.constant 0 : index
    %c0_7 = arith.constant 0 : index
    %20 = vector.load %arg2[%c0_6, %c0_7] : memref<1x32xf32, #tpu.memory_space<vmem>>, vector<1x32xf32>
    %21 = vector.broadcast %20 : vector<1x32xf32> to vector<8x32xf32>
    %22 = arith.mulf %19, %21 : vector<8x32xf32>
    %c0_8 = arith.constant 0 : index
    %c0_9 = arith.constant 0 : index
    %23 = vector.load %arg3[%c0_8, %c0_9] : memref<1x32xf32, #tpu.memory_space<vmem>>, vector<1x32xf32>
    %24 = vector.broadcast %23 : vector<1x32xf32> to vector<8x32xf32>
    %25 = arith.addf %22, %24 : vector<8x32xf32>
    %26 = arith.truncf %25 : vector<8x32xf32> to vector<8x32xbf16>
    %c0_10 = arith.constant 0 : index
    %c0_11 = arith.constant 0 : index
    %27 = vector.load %arg4[%c0_10, %c0_11] : memref<32x96xbf16, #tpu.memory_space<vmem>>, vector<32x96xbf16>
    %cst_12 = arith.constant dense<0.000000e+00> : vector<8x96xf32>
    %28 = tpu.matmul %26, %27, %cst_12 {dimension_numbers = #tpu.dot_dimension_numbers<[1], [0], [0], [1], [0, 0, 1, 1], [], []>} : vector<8x32xbf16>, vector<32x96xbf16>, vector<8x96xf32> -> vector<8x96xf32>
    %c0_13 = arith.constant 0 : index
    %c0_14 = arith.constant 0 : index
    %29 = vector.load %arg5[%c0_13, %c0_14] : memref<1x96xf32, #tpu.memory_space<vmem>>, vector<1x96xf32>
    %30 = vector.broadcast %29 : vector<1x96xf32> to vector<8x96xf32>
    %31 = arith.addf %28, %30 : vector<8x96xf32>
    %32 = vector.extract_strided_slice %31 {offsets = [0, 0], sizes = [8, 32], strides = [1, 1]} : vector<8x96xf32> to vector<8x32xf32>
    %33 = vector.extract_strided_slice %31 {offsets = [0, 32], sizes = [8, 32], strides = [1, 1]} : vector<8x96xf32> to vector<8x32xf32>
    %34 = vector.extract_strided_slice %31 {offsets = [0, 64], sizes = [8, 32], strides = [1, 1]} : vector<8x96xf32> to vector<8x32xf32>
    %35 = vector.extract_strided_slice %32 {offsets = [0, 0], sizes = [8, 8], strides = [1, 1]} : vector<8x32xf32> to vector<8x8xf32>
    %36 = arith.truncf %35 : vector<8x8xf32> to vector<8x8xbf16>
    %37 = vector.extract_strided_slice %33 {offsets = [0, 0], sizes = [8, 8], strides = [1, 1]} : vector<8x32xf32> to vector<8x8xf32>
    %38 = arith.truncf %37 : vector<8x8xf32> to vector<8x8xbf16>
    %39 = vector.extract_strided_slice %34 {offsets = [0, 0], sizes = [8, 8], strides = [1, 1]} : vector<8x32xf32> to vector<8x8xf32>
    %40 = arith.truncf %39 : vector<8x8xf32> to vector<8x8xbf16>
    %cst_15 = arith.constant dense<0.000000e+00> : vector<8x8xf32>
    %41 = tpu.matmul %36, %38, %cst_15 {dimension_numbers = #tpu.dot_dimension_numbers<[1], [1], [0], [0], [0, 0, 1, 0], [], []>} : vector<8x8xbf16>, vector<8x8xbf16>, vector<8x8xf32> -> vector<8x8xf32>
    %cst_16 = arith.constant 0.176776692 : f32
    %42 = vector.broadcast %cst_16 : f32 to vector<8x8xf32>
    %43 = arith.mulf %41, %42 : vector<8x8xf32>
    %cst_17 = arith.constant dense<0xFF800000> : vector<8xf32>
    %44 = vector.multi_reduction <maximumf>, %43, %cst_17 [1] : vector<8x8xf32> to vector<8xf32>
    %45 = vector.shape_cast %44 : vector<8xf32> to vector<8x1xf32>
    %46 = vector.broadcast %45 : vector<8x1xf32> to vector<8x8xf32>
    %47 = arith.subf %43, %46 : vector<8x8xf32>
    %48 = math.exp %47 : vector<8x8xf32>
    %cst_18 = arith.constant dense<0.000000e+00> : vector<8xf32>
    %49 = vector.multi_reduction <add>, %48, %cst_18 [1] : vector<8x8xf32> to vector<8xf32>
    %50 = vector.shape_cast %49 : vector<8xf32> to vector<8x1xf32>
    %51 = tpu.reciprocal %50 {approx = true} : vector<8x1xf32> -> vector<8x1xf32>
    %52 = vector.broadcast %51 : vector<8x1xf32> to vector<8x8xf32>
    %53 = arith.mulf %48, %52 : vector<8x8xf32>
    %54 = arith.truncf %53 : vector<8x8xf32> to vector<8x8xbf16>
    %cst_19 = arith.constant dense<0.000000e+00> : vector<8x8xf32>
    %55 = tpu.matmul %54, %40, %cst_19 {dimension_numbers = #tpu.dot_dimension_numbers<[1], [0], [0], [1], [0, 0, 1, 1], [], []>} : vector<8x8xbf16>, vector<8x8xbf16>, vector<8x8xf32> -> vector<8x8xf32>
    %c0_20 = arith.constant 0 : index
    %c0_21 = arith.constant 0 : index
    %56 = vector.load %arg15[%c0_20, %c0_21] : memref<8x32xf32, #tpu.memory_space<vmem>>, vector<8x8xf32>
    tpu.vector_store %arg15[%c0_20, %c0_21], %55 {strides = array<i32>} : memref<8x32xf32, #tpu.memory_space<vmem>>, vector<8x8xf32>,
    %57 = vector.extract_strided_slice %32 {offsets = [0, 8], sizes = [8, 8], strides = [1, 1]} : vector<8x32xf32> to vector<8x8xf32>
    %58 = arith.truncf %57 : vector<8x8xf32> to vector<8x8xbf16>
    %59 = vector.extract_strided_slice %33 {offsets = [0, 8], sizes = [8, 8], strides = [1, 1]} : vector<8x32xf32> to vector<8x8xf32>
    %60 = arith.truncf %59 : vector<8x8xf32> to vector<8x8xbf16>
    %61 = vector.extract_strided_slice %34 {offsets = [0, 8], sizes = [8, 8], strides = [1, 1]} : vector<8x32xf32> to vector<8x8xf32>
    %62 = arith.truncf %61 : vector<8x8xf32> to vector<8x8xbf16>
    %cst_22 = arith.constant dense<0.000000e+00> : vector<8x8xf32>
    %63 = tpu.matmul %58, %60, %cst_22 {dimension_numbers = #tpu.dot_dimension_numbers<[1], [1], [0], [0], [0, 0, 1, 0], [], []>} : vector<8x8xbf16>, vector<8x8xbf16>, vector<8x8xf32> -> vector<8x8xf32>
    %cst_23 = arith.constant 0.176776692 : f32
    %64 = vector.broadcast %cst_23 : f32 to vector<8x8xf32>
    %65 = arith.mulf %63, %64 : vector<8x8xf32>
    %cst_24 = arith.constant dense<0xFF800000> : vector<8xf32>
    %66 = vector.multi_reduction <maximumf>, %65, %cst_24 [1] : vector<8x8xf32> to vector<8xf32>
    %67 = vector.shape_cast %66 : vector<8xf32> to vector<8x1xf32>
    %68 = vector.broadcast %67 : vector<8x1xf32> to vector<8x8xf32>
    %69 = arith.subf %65, %68 : vector<8x8xf32>
    %70 = math.exp %69 : vector<8x8xf32>
    %cst_25 = arith.constant dense<0.000000e+00> : vector<8xf32>
    %71 = vector.multi_reduction <add>, %70, %cst_25 [1] : vector<8x8xf32> to vector<8xf32>
    %72 = vector.shape_cast %71 : vector<8xf32> to vector<8x1xf32>
    %73 = tpu.reciprocal %72 {approx = true} : vector<8x1xf32> -> vector<8x1xf32>
    %74 = vector.broadcast %73 : vector<8x1xf32> to vector<8x8xf32>
    %75 = arith.mulf %70, %74 : vector<8x8xf32>
    %76 = arith.truncf %75 : vector<8x8xf32> to vector<8x8xbf16>
    %cst_26 = arith.constant dense<0.000000e+00> : vector<8x8xf32>
    %77 = tpu.matmul %76, %62, %cst_26 {dimension_numbers = #tpu.dot_dimension_numbers<[1], [0], [0], [1], [0, 0, 1, 1], [], []>} : vector<8x8xbf16>, vector<8x8xbf16>, vector<8x8xf32> -> vector<8x8xf32>
    %c0_27 = arith.constant 0 : index
    %c8 = arith.constant 8 : index
    %78 = vector.load %arg15[%c0_27, %c8] : memref<8x32xf32, #tpu.memory_space<vmem>>, vector<8x8xf32>
    tpu.vector_store %arg15[%c0_27, %c8], %77 {strides = array<i32>} : memref<8x32xf32, #tpu.memory_space<vmem>>, vector<8x8xf32>,
    %79 = vector.extract_strided_slice %32 {offsets = [0, 16], sizes = [8, 8], strides = [1, 1]} : vector<8x32xf32> to vector<8x8xf32>
    %80 = arith.truncf %79 : vector<8x8xf32> to vector<8x8xbf16>
    %81 = vector.extract_strided_slice %33 {offsets = [0, 16], sizes = [8, 8], strides = [1, 1]} : vector<8x32xf32> to vector<8x8xf32>
    %82 = arith.truncf %81 : vector<8x8xf32> to vector<8x8xbf16>
    %83 = vector.extract_strided_slice %34 {offsets = [0, 16], sizes = [8, 8], strides = [1, 1]} : vector<8x32xf32> to vector<8x8xf32>
    %84 = arith.truncf %83 : vector<8x8xf32> to vector<8x8xbf16>
    %cst_28 = arith.constant dense<0.000000e+00> : vector<8x8xf32>
    %85 = tpu.matmul %80, %82, %cst_28 {dimension_numbers = #tpu.dot_dimension_numbers<[1], [1], [0], [0], [0, 0, 1, 0], [], []>} : vector<8x8xbf16>, vector<8x8xbf16>, vector<8x8xf32> -> vector<8x8xf32>
    %cst_29 = arith.constant 0.176776692 : f32
    %86 = vector.broadcast %cst_29 : f32 to vector<8x8xf32>
    %87 = arith.mulf %85, %86 : vector<8x8xf32>
    %cst_30 = arith.constant dense<0xFF800000> : vector<8xf32>
    %88 = vector.multi_reduction <maximumf>, %87, %cst_30 [1] : vector<8x8xf32> to vector<8xf32>
    %89 = vector.shape_cast %88 : vector<8xf32> to vector<8x1xf32>
    %90 = vector.broadcast %89 : vector<8x1xf32> to vector<8x8xf32>
    %91 = arith.subf %87, %90 : vector<8x8xf32>
    %92 = math.exp %91 : vector<8x8xf32>
    %cst_31 = arith.constant dense<0.000000e+00> : vector<8xf32>
    %93 = vector.multi_reduction <add>, %92, %cst_31 [1] : vector<8x8xf32> to vector<8xf32>
    %94 = vector.shape_cast %93 : vector<8xf32> to vector<8x1xf32>
    %95 = tpu.reciprocal %94 {approx = true} : vector<8x1xf32> -> vector<8x1xf32>
    %96 = vector.broadcast %95 : vector<8x1xf32> to vector<8x8xf32>
    %97 = arith.mulf %92, %96 : vector<8x8xf32>
    %98 = arith.truncf %97 : vector<8x8xf32> to vector<8x8xbf16>
    %cst_32 = arith.constant dense<0.000000e+00> : vector<8x8xf32>
    %99 = tpu.matmul %98, %84, %cst_32 {dimension_numbers = #tpu.dot_dimension_numbers<[1], [0], [0], [1], [0, 0, 1, 1], [], []>} : vector<8x8xbf16>, vector<8x8xbf16>, vector<8x8xf32> -> vector<8x8xf32>
    %c0_33 = arith.constant 0 : index
    %c16 = arith.constant 16 : index
    %100 = vector.load %arg15[%c0_33, %c16] : memref<8x32xf32, #tpu.memory_space<vmem>>, vector<8x8xf32>
    tpu.vector_store %arg15[%c0_33, %c16], %99 {strides = array<i32>} : memref<8x32xf32, #tpu.memory_space<vmem>>, vector<8x8xf32>,
    %101 = vector.extract_strided_slice %32 {offsets = [0, 24], sizes = [8, 8], strides = [1, 1]} : vector<8x32xf32> to vector<8x8xf32>
    %102 = arith.truncf %101 : vector<8x8xf32> to vector<8x8xbf16>
    %103 = vector.extract_strided_slice %33 {offsets = [0, 24], sizes = [8, 8], strides = [1, 1]} : vector<8x32xf32> to vector<8x8xf32>
    %104 = arith.truncf %103 : vector<8x8xf32> to vector<8x8xbf16>
    %105 = vector.extract_strided_slice %34 {offsets = [0, 24], sizes = [8, 8], strides = [1, 1]} : vector<8x32xf32> to vector<8x8xf32>
    %106 = arith.truncf %105 : vector<8x8xf32> to vector<8x8xbf16>
    %cst_34 = arith.constant dense<0.000000e+00> : vector<8x8xf32>
    %107 = tpu.matmul %102, %104, %cst_34 {dimension_numbers = #tpu.dot_dimension_numbers<[1], [1], [0], [0], [0, 0, 1, 0], [], []>} : vector<8x8xbf16>, vector<8x8xbf16>, vector<8x8xf32> -> vector<8x8xf32>
    %cst_35 = arith.constant 0.176776692 : f32
    %108 = vector.broadcast %cst_35 : f32 to vector<8x8xf32>
    %109 = arith.mulf %107, %108 : vector<8x8xf32>
    %cst_36 = arith.constant dense<0xFF800000> : vector<8xf32>
    %110 = vector.multi_reduction <maximumf>, %109, %cst_36 [1] : vector<8x8xf32> to vector<8xf32>
    %111 = vector.shape_cast %110 : vector<8xf32> to vector<8x1xf32>
    %112 = vector.broadcast %111 : vector<8x1xf32> to vector<8x8xf32>
    %113 = arith.subf %109, %112 : vector<8x8xf32>
    %114 = math.exp %113 : vector<8x8xf32>
    %cst_37 = arith.constant dense<0.000000e+00> : vector<8xf32>
    %115 = vector.multi_reduction <add>, %114, %cst_37 [1] : vector<8x8xf32> to vector<8xf32>
    %116 = vector.shape_cast %115 : vector<8xf32> to vector<8x1xf32>
    %117 = tpu.reciprocal %116 {approx = true} : vector<8x1xf32> -> vector<8x1xf32>
    %118 = vector.broadcast %117 : vector<8x1xf32> to vector<8x8xf32>
    %119 = arith.mulf %114, %118 : vector<8x8xf32>
    %120 = arith.truncf %119 : vector<8x8xf32> to vector<8x8xbf16>
    %cst_38 = arith.constant dense<0.000000e+00> : vector<8x8xf32>
    %121 = tpu.matmul %120, %106, %cst_38 {dimension_numbers = #tpu.dot_dimension_numbers<[1], [0], [0], [1], [0, 0, 1, 1], [], []>} : vector<8x8xbf16>, vector<8x8xbf16>, vector<8x8xf32> -> vector<8x8xf32>
    %c0_39 = arith.constant 0 : index
    %c24 = arith.constant 24 : index
    %122 = vector.load %arg15[%c0_39, %c24] : memref<8x32xf32, #tpu.memory_space<vmem>>, vector<8x8xf32>
    tpu.vector_store %arg15[%c0_39, %c24], %121 {strides = array<i32>} : memref<8x32xf32, #tpu.memory_space<vmem>>, vector<8x8xf32>,
    %c0_40 = arith.constant 0 : index
    %c0_41 = arith.constant 0 : index
    %123 = vector.load %arg15[%c0_40, %c0_41] : memref<8x32xf32, #tpu.memory_space<vmem>>, vector<8x32xf32>
    %124 = arith.truncf %123 : vector<8x32xf32> to vector<8x32xbf16>
    %c0_42 = arith.constant 0 : index
    %c0_43 = arith.constant 0 : index
    %125 = vector.load %arg6[%c0_42, %c0_43] : memref<32x32xbf16, #tpu.memory_space<vmem>>, vector<32x32xbf16>
    %cst_44 = arith.constant dense<0.000000e+00> : vector<8x32xf32>
    %126 = tpu.matmul %124, %125, %cst_44 {dimension_numbers = #tpu.dot_dimension_numbers<[1], [0], [0], [1], [0, 0, 1, 1], [], []>} : vector<8x32xbf16>, vector<32x32xbf16>, vector<8x32xf32> -> vector<8x32xf32>
    %c0_45 = arith.constant 0 : index
    %c0_46 = arith.constant 0 : index
    %127 = vector.load %arg7[%c0_45, %c0_46] : memref<1x32xf32, #tpu.memory_space<vmem>>, vector<1x32xf32>
    %128 = vector.broadcast %127 : vector<1x32xf32> to vector<8x32xf32>
    %129 = arith.addf %126, %128 : vector<8x32xf32>
    %130 = arith.addf %1, %129 : vector<8x32xf32>
    %cst_47 = arith.constant dense<0.000000e+00> : vector<8xf32>
    %131 = vector.multi_reduction <add>, %130, %cst_47 [1] : vector<8x32xf32> to vector<8xf32>
    %132 = vector.shape_cast %131 : vector<8xf32> to vector<8x1xf32>
    %cst_48 = arith.constant 3.200000e+01 : f32
    %133 = vector.broadcast %cst_48 : f32 to vector<8x1xf32>
    %134 = arith.divf %132, %133 : vector<8x1xf32>
    %135 = vector.broadcast %134 : vector<8x1xf32> to vector<8x32xf32>
    %136 = arith.subf %130, %135 : vector<8x32xf32>
    %137 = arith.mulf %136, %136 : vector<8x32xf32>
    %cst_49 = arith.constant dense<0.000000e+00> : vector<8xf32>
    %138 = vector.multi_reduction <add>, %137, %cst_49 [1] : vector<8x32xf32> to vector<8xf32>
    %139 = vector.shape_cast %138 : vector<8xf32> to vector<8x1xf32>
    %cst_50 = arith.constant 3.200000e+01 : f32
    %140 = vector.broadcast %cst_50 : f32 to vector<8x1xf32>
    %141 = arith.divf %139, %140 : vector<8x1xf32>
    %142 = vector.broadcast %134 : vector<8x1xf32> to vector<8x32xf32>
    %143 = arith.subf %130, %142 : vector<8x32xf32>
    %cst_51 = arith.constant 9.99999974E-6 : f32
    %144 = vector.broadcast %cst_51 : f32 to vector<8x1xf32>
    %145 = arith.addf %141, %144 : vector<8x1xf32>
    %146 = math.rsqrt %145 : vector<8x1xf32>
    %147 = vector.broadcast %146 : vector<8x1xf32> to vector<8x32xf32>
    %148 = arith.mulf %143, %147 : vector<8x32xf32>
    %c0_52 = arith.constant 0 : index
    %c0_53 = arith.constant 0 : index
    %149 = vector.load %arg8[%c0_52, %c0_53] : memref<1x32xf32, #tpu.memory_space<vmem>>, vector<1x32xf32>
    %150 = vector.broadcast %149 : vector<1x32xf32> to vector<8x32xf32>
    %151 = arith.mulf %148, %150 : vector<8x32xf32>
    %c0_54 = arith.constant 0 : index
    %c0_55 = arith.constant 0 : index
    %152 = vector.load %arg9[%c0_54, %c0_55] : memref<1x32xf32, #tpu.memory_space<vmem>>, vector<1x32xf32>
    %153 = vector.broadcast %152 : vector<1x32xf32> to vector<8x32xf32>
    %154 = arith.addf %151, %153 : vector<8x32xf32>
    %155 = arith.truncf %154 : vector<8x32xf32> to vector<8x32xbf16>
    %c0_56 = arith.constant 0 : index
    %c0_57 = arith.constant 0 : index
    %156 = vector.load %arg10[%c0_56, %c0_57] : memref<32x128xbf16, #tpu.memory_space<vmem>>, vector<32x128xbf16>
    %cst_58 = arith.constant dense<0.000000e+00> : vector<8x128xf32>
    %157 = tpu.matmul %155, %156, %cst_58 {dimension_numbers = #tpu.dot_dimension_numbers<[1], [0], [0], [1], [0, 0, 1, 1], [], []>} : vector<8x32xbf16>, vector<32x128xbf16>, vector<8x128xf32> -> vector<8x128xf32>
    %c0_59 = arith.constant 0 : index
    %c0_60 = arith.constant 0 : index
    %158 = vector.load %arg11[%c0_59, %c0_60] : memref<1x128xf32, #tpu.memory_space<vmem>>, vector<1x128xf32>
    %159 = vector.broadcast %158 : vector<1x128xf32> to vector<8x128xf32>
    %160 = arith.addf %157, %159 : vector<8x128xf32>
    %cst_61 = arith.constant 5.000000e-01 : f32
    %161 = vector.broadcast %cst_61 : f32 to vector<8x128xf32>
    %162 = arith.mulf %161, %160 : vector<8x128xf32>
    %cst_62 = arith.constant 4.471500e-02 : f32
    %163 = vector.broadcast %cst_62 : f32 to vector<8x128xf32>
    %164 = arith.mulf %163, %160 : vector<8x128xf32>
    %165 = arith.mulf %164, %160 : vector<8x128xf32>
    %166 = arith.mulf %165, %160 : vector<8x128xf32>
    %167 = arith.addf %160, %166 : vector<8x128xf32>
    %cst_63 = arith.constant 0.797884583 : f32
    %168 = vector.broadcast %cst_63 : f32 to vector<8x128xf32>
    %169 = arith.mulf %168, %167 : vector<8x128xf32>
    %170 = math.tanh %169 : vector<8x128xf32>
    %cst_64 = arith.constant 1.000000e+00 : f32
    %171 = vector.broadcast %cst_64 : f32 to vector<8x128xf32>
    %172 = arith.addf %171, %170 : vector<8x128xf32>
    %173 = arith.mulf %162, %172 : vector<8x128xf32>
    %174 = arith.truncf %173 : vector<8x128xf32> to vector<8x128xbf16>
    %c0_65 = arith.constant 0 : index
    %c0_66 = arith.constant 0 : index
    %175 = vector.load %arg12[%c0_65, %c0_66] : memref<128x32xbf16, #tpu.memory_space<vmem>>, vector<128x32xbf16>
    %cst_67 = arith.constant dense<0.000000e+00> : vector<8x32xf32>
    %176 = tpu.matmul %174, %175, %cst_67 {dimension_numbers = #tpu.dot_dimension_numbers<[1], [0], [0], [1], [0, 0, 1, 1], [], []>} : vector<8x128xbf16>, vector<128x32xbf16>, vector<8x32xf32> -> vector<8x32xf32>
    %c0_68 = arith.constant 0 : index
    %c0_69 = arith.constant 0 : index
    %177 = vector.load %arg13[%c0_68, %c0_69] : memref<1x32xf32, #tpu.memory_space<vmem>>, vector<1x32xf32>
    %178 = vector.broadcast %177 : vector<1x32xf32> to vector<8x32xf32>
    %179 = arith.addf %176, %178 : vector<8x32xf32>
    %180 = arith.addf %130, %179 : vector<8x32xf32>
    %c0_70 = arith.constant 0 : index
    %c0_71 = arith.constant 0 : index
    %c0_72 = arith.constant 0 : index
    %181 = vector.load %arg14[%c0_70, %c0_71, %c0_72] : memref<1x8x32xf32, #tpu.memory_space<vmem>>, vector<1x8x32xf32>
    %182 = vector.shape_cast %181 : vector<1x8x32xf32> to vector<8x32xf32>
    %183 = vector.shape_cast %180 : vector<8x32xf32> to vector<1x8x32xf32>
    tpu.vector_store %arg14[%c0_70, %c0_71, %c0_72], %183 {strides = array<i32>} : memref<1x8x32xf32, #tpu.memory_space<vmem>>, vector<1x8x32xf32>,
    return
  }
  func.func @transform_0(%arg0: i32) -> (i32, i32, i32) {
    %c0_i32 = arith.constant 0 : i32
    %c0_i32_0 = arith.constant 0 : i32
    %c0_i32_1 = arith.constant 0 : i32
    return %arg0, %c0_i32, %c0_i32_0 : i32, i32, i32
  }
  func.func @transform_1(%arg0: i32) -> (i32, i32) {
    %c0_i32 = arith.constant 0 : i32
    %c0_i32_0 = arith.constant 0 : i32
    %c0_i32_1 = arith.constant 0 : i32
    return %c0_i32, %c0_i32_0 : i32, i32
  }
  func.func @transform_2(%arg0: i32) -> (i32, i32) {
    %c0_i32 = arith.constant 0 : i32
    %c0_i32_0 = arith.constant 0 : i32
    %c0_i32_1 = arith.constant 0 : i32
    return %c0_i32, %c0_i32_0 : i32, i32
  }
  func.func @transform_3(%arg0: i32) -> (i32, i32) {
    %c0_i32 = arith.constant 0 : i32
    %c0_i32_0 = arith.constant 0 : i32
    %c0_i32_1 = arith.constant 0 : i32
    return %c0_i32, %c0_i32_0 : i32, i32
  }
  func.func @transform_4(%arg0: i32) -> (i32, i32) {
    %c0_i32 = arith.constant 0 : i32
    %c0_i32_0 = arith.constant 0 : i32
    %c0_i32_1 = arith.constant 0 : i32
    return %c0_i32, %c0_i32_0 : i32, i32
  }
  func.func @transform_5(%arg0: i32) -> (i32, i32) {
    %c0_i32 = arith.constant 0 : i32
    %c0_i32_0 = arith.constant 0 : i32
    %c0_i32_1 = arith.constant 0 : i32
    return %c0_i32, %c0_i32_0 : i32, i32
  }
  func.func @transform_6(%arg0: i32) -> (i32, i32) {
    %c0_i32 = arith.constant 0 : i32
    %c0_i32_0 = arith.constant 0 : i32
    %c0_i32_1 = arith.constant 0 : i32
    return %c0_i32, %c0_i32_0 : i32, i32
  }
  func.func @transform_7(%arg0: i32) -> (i32, i32) {
    %c0_i32 = arith.constant 0 : i32
    %c0_i32_0 = arith.constant 0 : i32
    %c0_i32_1 = arith.constant 0 : i32
    return %c0_i32, %c0_i32_0 : i32, i32
  }
  func.func @transform_8(%arg0: i32) -> (i32, i32) {
    %c0_i32 = arith.constant 0 : i32
    %c0_i32_0 = arith.constant 0 : i32
    %c0_i32_1 = arith.constant 0 : i32
    return %c0_i32, %c0_i32_0 : i32, i32
  }
  func.func @transform_9(%arg0: i32) -> (i32, i32) {
    %c0_i32 = arith.constant 0 : i32
    %c0_i32_0 = arith.constant 0 : i32
    %c0_i32_1 = arith.constant 0 : i32
    return %c0_i32, %c0_i32_0 : i32, i32
  }
  func.func @transform_10(%arg0: i32) -> (i32, i32) {
    %c0_i32 = arith.constant 0 : i32
    %c0_i32_0 = arith.constant 0 : i32
    %c0_i32_1 = arith.constant 0 : i32
    return %c0_i32, %c0_i32_0 : i32, i32
  }
  func.func @transform_11(%arg0: i32) -> (i32, i32) {
    %c0_i32 = arith.constant 0 : i32
    %c0_i32_0 = arith.constant 0 : i32
    %c0_i32_1 = arith.constant 0 : i32
    return %c0_i32, %c0_i32_0 : i32, i32
  }
  func.func @transform_12(%arg0: i32) -> (i32, i32) {
    %c0_i32 = arith.constant 0 : i32
    %c0_i32_0 = arith.constant 0 : i32
    %c0_i32_1 = arith.constant 0 : i32
    return %c0_i32, %c0_i32_0 : i32, i32
  }
  func.func @transform_13(%arg0: i32) -> (i32, i32, i32) {
    %c0_i32 = arith.constant 0 : i32
    %c0_i32_0 = arith.constant 0 : i32
    %c0_i32_1 = arith.constant 0 : i32
    return %arg0, %c0_i32, %c0_i32_0 : i32, i32, i32
  }
}

</mosaic_0001>

<llo_original>
// kernel: tpu_custom_call.1
$region0: #{tpu_custom_call.1}
  #allocation0 [shape = 'u32[]', space=smem, size = 0x4, offset = 0x4, fixed_abs, tag = 'smem constant byte address 0x4 - core index']
  #allocation1 [shape = 'u32[144,128]{1,0:T(1,128)}', space=vmem, size = 0x12000, scoped, tag = 'internal scratch']
  #allocation2 [shape = 'f32[8,32]{1,0:T(8,128)}', space=vmem, size = 0x1000, scoped, tag = 'scratch operand']
  %s0 = inlined_call_operand.hbm [shape: f32[2,8,32], index: 0, kind: input, shape index: {}]
  %s1 = inlined_call_operand.hbm [shape: f32[1,32], index: 1, kind: input, shape index: {}]
  %s2 = inlined_call_operand.hbm [shape: f32[1,32], index: 2, kind: input, shape index: {}]
  %s3 = inlined_call_operand.hbm [shape: bf16[32,96], index: 3, kind: input, shape index: {}]
  %s4 = inlined_call_operand.hbm [shape: f32[1,96], index: 4, kind: input, shape index: {}]
  %s5 = inlined_call_operand.hbm [shape: bf16[32,32], index: 5, kind: input, shape index: {}]
  %s6 = inlined_call_operand.hbm [shape: f32[1,32], index: 6, kind: input, shape index: {}]
  %s7 = inlined_call_operand.hbm [shape: f32[1,32], index: 7, kind: input, shape index: {}]
  %s8 = inlined_call_operand.hbm [shape: f32[1,32], index: 8, kind: input, shape index: {}]
  %s9 = inlined_call_operand.hbm [shape: bf16[32,128], index: 9, kind: input, shape index: {}]
  %s10 = inlined_call_operand.hbm [shape: f32[1,128], index: 10, kind: input, shape index: {}]
  %s11 = inlined_call_operand.hbm [shape: bf16[128,32], index: 11, kind: input, shape index: {}]
  %s12 = inlined_call_operand.hbm [shape: f32[1,32], index: 12, kind: input, shape index: {}]
  %s13 = inlined_call_operand.hbm [shape: f32[2,8,32], index: 13, kind: output, shape index: {}]
  %s14 = sld [smem:[#allocation0]]
  $region137: #{tpu_custom_call.1} parent=0
    _
  %s16 = ssub.s32 1, %s14
  %s17 = scalar_select 0, %s16, %s14
  $region1: #{tpu_custom_call.1} parent=0
    #allocation3 [shape = 'u8[8192]{0}', space=vmem, size = 0x2000, scoped, tag = 'input window, operand 0']
    #allocation4 [shape = 's32[2]{0}', space=sflag, size = 0x8, scoped, tag = 'scoped memory for tpu_custom_call.1']
    #allocation5 [shape = 's32[2]{0}', space=sflag, size = 0x8, scoped, tag = 'scoped memory for tpu_custom_call.1']
    #allocation6 [shape = 'u8[512]{0}', space=vmem, size = 0x400, scoped, tag = 'input window, operand 1, single buffered']
    #allocation7 [shape = 's32[1]{0}', space=sflag, size = 0x4, scoped, tag = 'scoped memory for tpu_custom_call.1']
    #allocation8 [shape = 'u8[512]{0}', space=vmem, size = 0x400, scoped, tag = 'input window, operand 2, single buffered']
    #allocation9 [shape = 'u8[8192]{0}', space=vmem, size = 0x2000, scoped, tag = 'input window, operand 3, single buffered']
    #allocation10 [shape = 's32[1]{0}', space=sflag, size = 0x4, scoped, tag = 'scoped memory for tpu_custom_call.1']
    #allocation11 [shape = 'u8[512]{0}', space=vmem, size = 0x400, scoped, tag = 'input window, operand 4, single buffered']
    #allocation12 [shape = 'u8[8192]{0}', space=vmem, size = 0x2000, scoped, tag = 'input window, operand 5, single buffered']
    #allocation13 [shape = 's32[1]{0}', space=sflag, size = 0x4, scoped, tag = 'scoped memory for tpu_custom_call.1']
    #allocation14 [shape = 'u8[512]{0}', space=vmem, size = 0x400, scoped, tag = 'input window, operand 6, single buffered']
    #allocation15 [shape = 'u8[512]{0}', space=vmem, size = 0x400, scoped, tag = 'input window, operand 7, single buffered']
    #allocation16 [shape = 's32[1]{0}', space=sflag, size = 0x4, scoped, tag = 'scoped memory for tpu_custom_call.1']
    #allocation17 [shape = 'u8[512]{0}', space=vmem, size = 0x400, scoped, tag = 'input window, operand 8, single buffered']
    #allocation18 [shape = 'u8[8192]{0}', space=vmem, size = 0x2000, scoped, tag = 'input window, operand 9, single buffered']
    #allocation19 [shape = 's32[1]{0}', space=sflag, size = 0x4, scoped, tag = 'scoped memory for tpu_custom_call.1']
    #allocation20 [shape = 'u8[512]{0}', space=vmem, size = 0x400, scoped, tag = 'input window, operand 10, single buffered']
    #allocation21 [shape = 'u8[32768]{0}', space=vmem, size = 0x8000, scoped, tag = 'input window, operand 11, single buffered']
    #allocation22 [shape = 's32[1]{0}', space=sflag, size = 0x4, scoped, tag = 'scoped memory for tpu_custom_call.1']
    #allocation23 [shape = 'u8[512]{0}', space=vmem, size = 0x400, scoped, tag = 'input window, operand 12, single buffered']
    #allocation24 [shape = 'u8[8192]{0}', space=vmem, size = 0x2000, scoped, tag = 'output window, operand 0']
    %18 = vsyncpa [#allocation4], 0
    %s19 = scalar_lea.sflag [#allocation4], 1
    %20 = vsyncpa %s19, 0
    %21 = vsyncpa [#allocation7], 0
    %22 = vsyncpa [#allocation10], 0
    %23 = vsyncpa [#allocation13], 0
    %24 = vsyncpa [#allocation16], 0
    %25 = vsyncpa [#allocation19], 0
    %26 = vsyncpa [#allocation22], 0
    %27 = vsyncpa [#allocation5], 0
    %s28 = scalar_lea.sflag [#allocation5], 1
    %29 = vsyncpa %s28, 0
    loop: start=0, step=1, limit=4
    $region2: #{tpu_custom_call.1} parent=1 // loop_pre_header
      _
    $region3: #{tpu_custom_call.1} parent=1 // loop_header
      %s31 = sphi 0, %s35
      %p32 = scmp.ge.s32.totalorder %s31, 4
      %s41 = sphi 0, %s43
      %s44 = sphi 0, %s41
      %s45 = sphi 0, %s44
      %s61 = sphi 0, %s45
      %s65 = sphi 0, %s65
      %s67 = sphi 0, %s65
      %s68 = sphi 0, %s67
      %s82 = sphi 0, %s68
      %s86 = sphi 0, %s86
      %s88 = sphi 0, %s86
      %s89 = sphi 0, %s88
      %s103 = sphi 0, %s89
      %s107 = sphi 0, %s107
      %s109 = sphi 0, %s107
      %s110 = sphi 0, %s109
      %s124 = sphi 0, %s110
      %s128 = sphi 0, %s128
      %s130 = sphi 0, %s128
      %s131 = sphi 0, %s130
      %s145 = sphi 0, %s131
      %s149 = sphi 0, %s149
      %s151 = sphi 0, %s149
      %s152 = sphi 0, %s151
      %s166 = sphi 0, %s152
      %s170 = sphi 0, %s170
      %s172 = sphi 0, %s170
      %s173 = sphi 0, %s172
      %s187 = sphi 0, %s173
      %s191 = sphi 0, %s191
      %s193 = sphi 0, %s191
      %s194 = sphi 0, %s193
      %s208 = sphi 0, %s194
      %s212 = sphi 0, %s212
      %s214 = sphi 0, %s212
      %s215 = sphi 0, %s214
      %s229 = sphi 0, %s215
      %s233 = sphi 0, %s233
      %s235 = sphi 0, %s233
      %s236 = sphi 0, %s235
      %s250 = sphi 0, %s236
      %s254 = sphi 0, %s254
      %s256 = sphi 0, %s254
      %s257 = sphi 0, %s256
      %s271 = sphi 0, %s257
      %s275 = sphi 0, %s275
      %s277 = sphi 0, %s275
      %s278 = sphi 0, %s277
      %s292 = sphi 0, %s278
      %s296 = sphi 0, %s296
      %s298 = sphi 0, %s296
      %s299 = sphi 0, %s298
      %s313 = sphi 0, %s299
      %s319 = sphi 0, %s321
      %s322 = sphi 0, %s319
      %s323 = sphi 0, %s322
      %s339 = sphi 0, %s323
    $region4: #{tpu_custom_call.1} parent=1 // loop_header_branch
      %34 = sbr.rel (%p32) target = $region8
    $region5: #{tpu_custom_call.1} parent=1 // loop_body
      %s36 = ssub.s32 %s31, 1
      %s37 = ssub.s32 %s31, 2
      %s38 = sadd.s32 %s31, 1
      %s39 = ssub.s32 %s31, %s38
      %p40 = scmp.eq.s32.totalorder %s39, 0
      %s42 = sadd.s32 %s41, 1
      %s43 = scalar_select %p40, %s41, %s42
      %p46 = pneg %p40
      %p47 = scmp.eq.s32.totalorder %s31, 1
      %p48 = por %p46, %p47
      %p49 = scmp.ne.s32.totalorder %s41, %s44
      %p50 = scmp.eq.s32.totalorder %s31, 0
      %p51 = por %p49, %p50
      %p52 = scmp.ne.s32.totalorder %s41, %s44
      %p53 = scmp.eq.s32.totalorder %s36, 1
      %p54 = por %p52, %p53
      %p55 = scmp.ne.s32.totalorder %s44, %s45
      %p56 = scmp.eq.s32.totalorder %s36, 0
      %p57 = por %p55, %p56
      %p58 = scmp.ne.s32.totalorder %s44, %s45
      %p59 = scmp.eq.s32.totalorder %s37, 1
      %p60 = por %p58, %p59
      %p62 = scmp.ne.s32.totalorder %s45, %s61
      %p63 = scmp.eq.s32.totalorder %s37, 0
      %p64 = por %p62, %p63
      %s66 = sadd.s32 %s65, 1
      %p69 = scmp.eq.s32.totalorder %s31, 1
      %p70 = scmp.ne.s32.totalorder %s65, %s67
      %p71 = scmp.eq.s32.totalorder %s31, 0
      %p72 = por %p70, %p71
      %p73 = scmp.ne.s32.totalorder %s65, %s67
      %p74 = scmp.eq.s32.totalorder %s36, 1
      %p75 = por %p73, %p74
      %p76 = scmp.ne.s32.totalorder %s67, %s68
      %p77 = scmp.eq.s32.totalorder %s36, 0
      %p78 = por %p76, %p77
      %p79 = scmp.ne.s32.totalorder %s67, %s68
      %p80 = scmp.eq.s32.totalorder %s37, 1
      %p81 = por %p79, %p80
      %p83 = scmp.ne.s32.totalorder %s68, %s82
      %p84 = scmp.eq.s32.totalorder %s37, 0
      %p85 = por %p83, %p84
      %s87 = sadd.s32 %s86, 1
      %p90 = scmp.eq.s32.totalorder %s31, 1
      %p91 = scmp.ne.s32.totalorder %s86, %s88
      %p92 = scmp.eq.s32.totalorder %s31, 0
      %p93 = por %p91, %p92
      %p94 = scmp.ne.s32.totalorder %s86, %s88
      %p95 = scmp.eq.s32.totalorder %s36, 1
      %p96 = por %p94, %p95
      %p97 = scmp.ne.s32.totalorder %s88, %s89
      %p98 = scmp.eq.s32.totalorder %s36, 0
      %p99 = por %p97, %p98
      %p100 = scmp.ne.s32.totalorder %s88, %s89
      %p101 = scmp.eq.s32.totalorder %s37, 1
      %p102 = por %p100, %p101
      %p104 = scmp.ne.s32.totalorder %s89, %s103
      %p105 = scmp.eq.s32.totalorder %s37, 0
      %p106 = por %p104, %p105
      %s108 = sadd.s32 %s107, 1
      %p111 = scmp.eq.s32.totalorder %s31, 1
      %p112 = scmp.ne.s32.totalorder %s107, %s109
      %p113 = scmp.eq.s32.totalorder %s31, 0
      %p114 = por %p112, %p113
      %p115 = scmp.ne.s32.totalorder %s107, %s109
      %p116 = scmp.eq.s32.totalorder %s36, 1
      %p117 = por %p115, %p116
      %p118 = scmp.ne.s32.totalorder %s109, %s110
      %p119 = scmp.eq.s32.totalorder %s36, 0
      %p120 = por %p118, %p119
      %p121 = scmp.ne.s32.totalorder %s109, %s110
      %p122 = scmp.eq.s32.totalorder %s37, 1
      %p123 = por %p121, %p122
      %p125 = scmp.ne.s32.totalorder %s110, %s124
      %p126 = scmp.eq.s32.totalorder %s37, 0
      %p127 = por %p125, %p126
      %s129 = sadd.s32 %s128, 1
      %p132 = scmp.eq.s32.totalorder %s31, 1
      %p133 = scmp.ne.s32.totalorder %s128, %s130
      %p134 = scmp.eq.s32.totalorder %s31, 0
      %p135 = por %p133, %p134
      %p136 = scmp.ne.s32.totalorder %s128, %s130
      %p137 = scmp.eq.s32.totalorder %s36, 1
      %p138 = por %p136, %p137
      %p139 = scmp.ne.s32.totalorder %s130, %s131
      %p140 = scmp.eq.s32.totalorder %s36, 0
      %p141 = por %p139, %p140
      %p142 = scmp.ne.s32.totalorder %s130, %s131
      %p143 = scmp.eq.s32.totalorder %s37, 1
      %p144 = por %p142, %p143
      %p146 = scmp.ne.s32.totalorder %s131, %s145
      %p147 = scmp.eq.s32.totalorder %s37, 0
      %p148 = por %p146, %p147
      %s150 = sadd.s32 %s149, 1
      %p153 = scmp.eq.s32.totalorder %s31, 1
      %p154 = scmp.ne.s32.totalorder %s149, %s151
      %p155 = scmp.eq.s32.totalorder %s31, 0
      %p156 = por %p154, %p155
      %p157 = scmp.ne.s32.totalorder %s149, %s151
      %p158 = scmp.eq.s32.totalorder %s36, 1
      %p159 = por %p157, %p158
      %p160 = scmp.ne.s32.totalorder %s151, %s152
      %p161 = scmp.eq.s32.totalorder %s36, 0
      %p162 = por %p160, %p161
      %p163 = scmp.ne.s32.totalorder %s151, %s152
      %p164 = scmp.eq.s32.totalorder %s37, 1
      %p165 = por %p163, %p164
      %p167 = scmp.ne.s32.totalorder %s152, %s166
      %p168 = scmp.eq.s32.totalorder %s37, 0
      %p169 = por %p167, %p168
      %s171 = sadd.s32 %s170, 1
      %p174 = scmp.eq.s32.totalorder %s31, 1
      %p175 = scmp.ne.s32.totalorder %s170, %s172
      %p176 = scmp.eq.s32.totalorder %s31, 0
      %p177 = por %p175, %p176
      %p178 = scmp.ne.s32.totalorder %s170, %s172
      %p179 = scmp.eq.s32.totalorder %s36, 1
      %p180 = por %p178, %p179
      %p181 = scmp.ne.s32.totalorder %s172, %s173
      %p182 = scmp.eq.s32.totalorder %s36, 0
      %p183 = por %p181, %p182
      %p184 = scmp.ne.s32.totalorder %s172, %s173
      %p185 = scmp.eq.s32.totalorder %s37, 1
      %p186 = por %p184, %p185
      %p188 = scmp.ne.s32.totalorder %s173, %s187
      %p189 = scmp.eq.s32.totalorder %s37, 0
      %p190 = por %p188, %p189
      %s192 = sadd.s32 %s191, 1
      %p195 = scmp.eq.s32.totalorder %s31, 1
      %p196 = scmp.ne.s32.totalorder %s191, %s193
      %p197 = scmp.eq.s32.totalorder %s31, 0
      %p198 = por %p196, %p197
      %p199 = scmp.ne.s32.totalorder %s191, %s193
      %p200 = scmp.eq.s32.totalorder %s36, 1
      %p201 = por %p199, %p200
      %p202 = scmp.ne.s32.totalorder %s193, %s194
      %p203 = scmp.eq.s32.totalorder %s36, 0
      %p204 = por %p202, %p203
      %p205 = scmp.ne.s32.totalorder %s193, %s194
      %p206 = scmp.eq.s32.totalorder %s37, 1
      %p207 = por %p205, %p206
      %p209 = scmp.ne.s32.totalorder %s194, %s208
      %p210 = scmp.eq.s32.totalorder %s37, 0
      %p211 = por %p209, %p210
      %s213 = sadd.s32 %s212, 1
      %p216 = scmp.eq.s32.totalorder %s31, 1
      %p217 = scmp.ne.s32.totalorder %s212, %s214
      %p218 = scmp.eq.s32.totalorder %s31, 0
      %p219 = por %p217, %p218
      %p220 = scmp.ne.s32.totalorder %s212, %s214
      %p221 = scmp.eq.s32.totalorder %s36, 1
      %p222 = por %p220, %p221
      %p223 = scmp.ne.s32.totalorder %s214, %s215
      %p224 = scmp.eq.s32.totalorder %s36, 0
      %p225 = por %p223, %p224
      %p226 = scmp.ne.s32.totalorder %s214, %s215
      %p227 = scmp.eq.s32.totalorder %s37, 1
      %p228 = por %p226, %p227
      %p230 = scmp.ne.s32.totalorder %s215, %s229
      %p231 = scmp.eq.s32.totalorder %s37, 0
      %p232 = por %p230, %p231
      %s234 = sadd.s32 %s233, 1
      %p237 = scmp.eq.s32.totalorder %s31, 1
      %p238 = scmp.ne.s32.totalorder %s233, %s235
      %p239 = scmp.eq.s32.totalorder %s31, 0
      %p240 = por %p238, %p239
      %p241 = scmp.ne.s32.totalorder %s233, %s235
      %p242 = scmp.eq.s32.totalorder %s36, 1
      %p243 = por %p241, %p242
      %p244 = scmp.ne.s32.totalorder %s235, %s236
      %p245 = scmp.eq.s32.totalorder %s36, 0
      %p246 = por %p244, %p245
      %p247 = scmp.ne.s32.totalorder %s235, %s236
      %p248 = scmp.eq.s32.totalorder %s37, 1
      %p249 = por %p247, %p248
      %p251 = scmp.ne.s32.totalorder %s236, %s250
      %p252 = scmp.eq.s32.totalorder %s37, 0
      %p253 = por %p251, %p252
      %s255 = sadd.s32 %s254, 1
      %p258 = scmp.eq.s32.totalorder %s31, 1
      %p259 = scmp.ne.s32.totalorder %s254, %s256
      %p260 = scmp.eq.s32.totalorder %s31, 0
      %p261 = por %p259, %p260
      %p262 = scmp.ne.s32.totalorder %s254, %s256
      %p263 = scmp.eq.s32.totalorder %s36, 1
      %p264 = por %p262, %p263
      %p265 = scmp.ne.s32.totalorder %s256, %s257
      %p266 = scmp.eq.s32.totalorder %s36, 0
      %p267 = por %p265, %p266
      %p268 = scmp.ne.s32.totalorder %s256, %s257
      %p269 = scmp.eq.s32.totalorder %s37, 1
      %p270 = por %p268, %p269
      %p272 = scmp.ne.s32.totalorder %s257, %s271
      %p273 = scmp.eq.s32.totalorder %s37, 0
      %p274 = por %p272, %p273
      %s276 = sadd.s32 %s275, 1
      %p279 = scmp.eq.s32.totalorder %s31, 1
      %p280 = scmp.ne.s32.totalorder %s275, %s277
      %p281 = scmp.eq.s32.totalorder %s31, 0
      %p282 = por %p280, %p281
      %p283 = scmp.ne.s32.totalorder %s275, %s277
      %p284 = scmp.eq.s32.totalorder %s36, 1
      %p285 = por %p283, %p284
      %p286 = scmp.ne.s32.totalorder %s277, %s278
      %p287 = scmp.eq.s32.totalorder %s36, 0
      %p288 = por %p286, %p287
      %p289 = scmp.ne.s32.totalorder %s277, %s278
      %p290 = scmp.eq.s32.totalorder %s37, 1
      %p291 = por %p289, %p290
      %p293 = scmp.ne.s32.totalorder %s278, %s292
      %p294 = scmp.eq.s32.totalorder %s37, 0
      %p295 = por %p293, %p294
      %s297 = sadd.s32 %s296, 1
      %p300 = scmp.eq.s32.totalorder %s31, 1
      %p301 = scmp.ne.s32.totalorder %s296, %s298
      %p302 = scmp.eq.s32.totalorder %s31, 0
      %p303 = por %p301, %p302
      %p304 = scmp.ne.s32.totalorder %s296, %s298
      %p305 = scmp.eq.s32.totalorder %s36, 1
      %p306 = por %p304, %p305
      %p307 = scmp.ne.s32.totalorder %s298, %s299
      %p308 = scmp.eq.s32.totalorder %s36, 0
      %p309 = por %p307, %p308
      %p310 = scmp.ne.s32.totalorder %s298, %s299
      %p311 = scmp.eq.s32.totalorder %s37, 1
      %p312 = por %p310, %p311
      %p314 = scmp.ne.s32.totalorder %s299, %s313
      %p315 = scmp.eq.s32.totalorder %s37, 0
      %p316 = por %p314, %p315
      %s317 = ssub.s32 %s31, %s38
      %p318 = scmp.eq.s32.totalorder %s317, 0
      %s320 = sadd.s32 %s319, 1
      %s321 = scalar_select %p318, %s319, %s320
      %p324 = pneg %p318
      %p325 = scmp.eq.s32.totalorder %s31, 1
      %p326 = por %p324, %p325
      %p327 = scmp.ne.s32.totalorder %s319, %s322
      %p328 = scmp.eq.s32.totalorder %s31, 0
      %p329 = por %p327, %p328
      %p330 = scmp.ne.s32.totalorder %s319, %s322
      %p331 = scmp.eq.s32.totalorder %s36, 1
      %p332 = por %p330, %p331
      %p333 = scmp.ne.s32.totalorder %s322, %s323
      %p334 = scmp.eq.s32.totalorder %s36, 0
      %p335 = por %p333, %p334
      %p336 = scmp.ne.s32.totalorder %s322, %s323
      %p337 = scmp.eq.s32.totalorder %s37, 1
      %p338 = por %p336, %p337
      %p340 = scmp.ne.s32.totalorder %s323, %s339
      %p341 = scmp.eq.s32.totalorder %s37, 0
      %p342 = por %p340, %p341
      %p343 = scmp.le.s32.totalorder 1, %s31
      %p344 = scmp.lt.s32.totalorder %s31, 3
      %p345 = pnand %p343, %p344
      %p346 = pneg %p345
      // Predicated region
      $region9: #{tpu_custom_call.1} parent=5 // pred_check
        _
      $region10: #{tpu_custom_call.1} parent=5 // pred_check_branch
        %348 = sbr.rel (%p345) target = $region12
      $region11: #{tpu_custom_call.1} parent=5 // pred_region
        %s349 = ssub.s32 %s31, 1
        // Predicated region
        $region13: #{tpu_custom_call.1} parent=11 // pred_check
          %p350 = pneg %p78
        $region14: #{tpu_custom_call.1} parent=11 // pred_check_branch
          %352 = sbr.rel (%p350) target = $region16
        $region15: #{tpu_custom_call.1} parent=11 // pred_region
          %s354 = ssub.s32 16, 16
          %355 = vsyncadd [#allocation7], %s354
          %s357 = sshll.u32 [#allocation6], 4
          %s358 = int_to_ptr.vmem [resolvable:$true] %s357
          %360 = dma.hbm_to_vmem [thread:$0]  %s1, 16, %s358, [#allocation7]
        $region16: #{tpu_custom_call.1} parent=11 // pred_fallthru
          _
        // Predicated region
        $region17: #{tpu_custom_call.1} parent=11 // pred_check
          %p361 = pneg %p99
        $region18: #{tpu_custom_call.1} parent=11 // pred_check_branch
          %363 = sbr.rel (%p361) target = $region20
        $region19: #{tpu_custom_call.1} parent=11 // pred_region
          %s365 = ssub.s32 16, 16
          %366 = vsyncadd [#allocation7], %s365
          %s368 = sshll.u32 [#allocation8], 4
          %s369 = int_to_ptr.vmem [resolvable:$true] %s368
          %371 = dma.hbm_to_vmem [thread:$0]  %s2, 16, %s369, [#allocation7]
        $region20: #{tpu_custom_call.1} parent=11 // pred_fallthru
          _
        // Predicated region
        $region21: #{tpu_custom_call.1} parent=11 // pred_check
          %p372 = pneg %p120
        $region22: #{tpu_custom_call.1} parent=11 // pred_check_branch
          %374 = sbr.rel (%p372) target = $region24
        $region23: #{tpu_custom_call.1} parent=11 // pred_region
          %s376 = ssub.s32 256, 256
          %377 = vsyncadd [#allocation10], %s376
          %s378 = sshll.u32 [#allocation9], 4
          %s379 = int_to_ptr.vmem [resolvable:$true] %s378
          %384 = dma.hbm_to_vmem [thread:$0]  %s3, 256, %s379, [#allocation10], 64, 64, 4
        $region24: #{tpu_custom_call.1} parent=11 // pred_fallthru
          _
        // Predicated region
        $region25: #{tpu_custom_call.1} parent=11 // pred_check
          %p385 = pneg %p141
        $region26: #{tpu_custom_call.1} parent=11 // pred_check_branch
          %387 = sbr.rel (%p385) target = $region28
        $region27: #{tpu_custom_call.1} parent=11 // pred_region
          %s389 = ssub.s32 16, 16
          %390 = vsyncadd [#allocation10], %s389
          %s392 = sshll.u32 [#allocation11], 4
          %s393 = int_to_ptr.vmem [resolvable:$true] %s392
          %395 = dma.hbm_to_vmem [thread:$0]  %s4, 16, %s393, [#allocation10]
        $region28: #{tpu_custom_call.1} parent=11 // pred_fallthru
          _
        // Predicated region
        $region29: #{tpu_custom_call.1} parent=11 // pred_check
          %p396 = pneg %p162
        $region30: #{tpu_custom_call.1} parent=11 // pred_check_branch
          %398 = sbr.rel (%p396) target = $region32
        $region31: #{tpu_custom_call.1} parent=11 // pred_region
          %s400 = ssub.s32 256, 256
          %401 = vsyncadd [#allocation13], %s400
          %s402 = sshll.u32 [#allocation12], 4
          %s403 = int_to_ptr.vmem [resolvable:$true] %s402
          %408 = dma.hbm_to_vmem [thread:$0]  %s5, 256, %s403, [#allocation13], 64, 64, 4
        $region32: #{tpu_custom_call.1} parent=11 // pred_fallthru
          _
        // Predicated region
        $region33: #{tpu_custom_call.1} parent=11 // pred_check
          %p409 = pneg %p183
        $region34: #{tpu_custom_call.1} parent=11 // pred_check_branch
          %411 = sbr.rel (%p409) target = $region36
        $region35: #{tpu_custom_call.1} parent=11 // pred_region
          %s413 = ssub.s32 16, 16
          %414 = vsyncadd [#allocation13], %s413
          %s416 = sshll.u32 [#allocation14], 4
          %s417 = int_to_ptr.vmem [resolvable:$true] %s416
          %419 = dma.hbm_to_vmem [thread:$0]  %s6, 16, %s417, [#allocation13]
        $region36: #{tpu_custom_call.1} parent=11 // pred_fallthru
          _
        // Predicated region
        $region37: #{tpu_custom_call.1} parent=11 // pred_check
          %p420 = pneg %p204
        $region38: #{tpu_custom_call.1} parent=11 // pred_check_branch
          %422 = sbr.rel (%p420) target = $region40
        $region39: #{tpu_custom_call.1} parent=11 // pred_region
          %s424 = ssub.s32 16, 16
          %425 = vsyncadd [#allocation16], %s424
          %s427 = sshll.u32 [#allocation15], 4
          %s428 = int_to_ptr.vmem [resolvable:$true] %s427
          %430 = dma.hbm_to_vmem [thread:$0]  %s7, 16, %s428, [#allocation16]
        $region40: #{tpu_custom_call.1} parent=11 // pred_fallthru
          _
        // Predicated region
        $region41: #{tpu_custom_call.1} parent=11 // pred_check
          %p431 = pneg %p225
        $region42: #{tpu_custom_call.1} parent=11 // pred_check_branch
          %433 = sbr.rel (%p431) target = $region44
        $region43: #{tpu_custom_call.1} parent=11 // pred_region
          %s435 = ssub.s32 16, 16
          %436 = vsyncadd [#allocation16], %s435
          %s438 = sshll.u32 [#allocation17], 4
          %s439 = int_to_ptr.vmem [resolvable:$true] %s438
          %441 = dma.hbm_to_vmem [thread:$0]  %s8, 16, %s439, [#allocation16]
        $region44: #{tpu_custom_call.1} parent=11 // pred_fallthru
          _
        // Predicated region
        $region45: #{tpu_custom_call.1} parent=11 // pred_check
          %p442 = pneg %p246
        $region46: #{tpu_custom_call.1} parent=11 // pred_check_branch
          %444 = sbr.rel (%p442) target = $region48
        $region47: #{tpu_custom_call.1} parent=11 // pred_region
          %s446 = ssub.s32 256, 256
          %447 = vsyncadd [#allocation19], %s446
          %s448 = sshll.u32 [#allocation18], 4
          %s449 = int_to_ptr.vmem [resolvable:$true] %s448
          %454 = dma.hbm_to_vmem [thread:$0]  %s9, 256, %s449, [#allocation19], 64, 64, 4
        $region48: #{tpu_custom_call.1} parent=11 // pred_fallthru
          _
        // Predicated region
        $region49: #{tpu_custom_call.1} parent=11 // pred_check
          %p455 = pneg %p267
        $region50: #{tpu_custom_call.1} parent=11 // pred_check_branch
          %457 = sbr.rel (%p455) target = $region52
        $region51: #{tpu_custom_call.1} parent=11 // pred_region
          %s459 = ssub.s32 16, 16
          %460 = vsyncadd [#allocation19], %s459
          %s462 = sshll.u32 [#allocation20], 4
          %s463 = int_to_ptr.vmem [resolvable:$true] %s462
          %465 = dma.hbm_to_vmem [thread:$0]  %s10, 16, %s463, [#allocation19]
        $region52: #{tpu_custom_call.1} parent=11 // pred_fallthru
          _
        // Predicated region
        $region53: #{tpu_custom_call.1} parent=11 // pred_check
          %p466 = pneg %p288
        $region54: #{tpu_custom_call.1} parent=11 // pred_check_branch
          %468 = sbr.rel (%p466) target = $region56
        $region55: #{tpu_custom_call.1} parent=11 // pred_region
          %s470 = ssub.s32 1024, 1024
          %471 = vsyncadd [#allocation22], %s470
          %s472 = sshll.u32 [#allocation21], 4
          %s473 = int_to_ptr.vmem [resolvable:$true] %s472
          %478 = dma.hbm_to_vmem [thread:$0]  %s11, 1024, %s473, [#allocation22], 64, 64, 4
        $region56: #{tpu_custom_call.1} parent=11 // pred_fallthru
          _
        // Predicated region
        $region57: #{tpu_custom_call.1} parent=11 // pred_check
          %p479 = pneg %p309
        $region58: #{tpu_custom_call.1} parent=11 // pred_check_branch
          %481 = sbr.rel (%p479) target = $region60
        $region59: #{tpu_custom_call.1} parent=11 // pred_region
          %s483 = ssub.s32 16, 16
          %484 = vsyncadd [#allocation22], %s483
          %s486 = sshll.u32 [#allocation23], 4
          %s487 = int_to_ptr.vmem [resolvable:$true] %s486
          %489 = dma.hbm_to_vmem [thread:$0]  %s12, 16, %s487, [#allocation22]
        $region60: #{tpu_custom_call.1} parent=11 // pred_fallthru
          _
      $region12: #{tpu_custom_call.1} parent=5 // pred_fallthru
        _
      %p490 = scmp.lt.s32.totalorder %s31, 2
      // Predicated region
      $region61: #{tpu_custom_call.1} parent=5 // pred_check
        %p491 = pneg %p490
      $region62: #{tpu_custom_call.1} parent=5 // pred_check_branch
        %493 = sbr.rel (%p491) target = $region64
      $region63: #{tpu_custom_call.1} parent=5 // pred_region
        // Predicated region
        $region65: #{tpu_custom_call.1} parent=63 // pred_check
          %p494 = pneg %p51
        $region66: #{tpu_custom_call.1} parent=63 // pred_check_branch
          %496 = sbr.rel (%p494) target = $region68
        $region67: #{tpu_custom_call.1} parent=63 // pred_region
          %s497 = sand.u32 %s41, 1
          %s498 = scalar_lea.sflag [#allocation4], %s497
          %s499 = sand.u32 %s41, 1
          %s500 = smul.addr %s499, 8
          %s501 = scalar_lea.vmem [#allocation3], %s500
          %s503 = ssub.s32 128, 128
          %504 = vsyncadd %s498, %s503
          %s505 = smul.addr %s31, 128
          %s506 = scalar_lea.hbm %s0, %s505
          %s508 = sshll.u32 %s501, 4
          %s509 = int_to_ptr.vmem [resolvable:$true] %s508
          %511 = dma.hbm_to_vmem [thread:$0]  %s506, 128, %s509, %s498
        $region68: #{tpu_custom_call.1} parent=63 // pred_fallthru
          _
      $region64: #{tpu_custom_call.1} parent=5 // pred_fallthru
        _
      %p512 = scmp.le.s32.totalorder 1, %s31
      %p513 = scmp.lt.s32.totalorder %s31, 3
      %p514 = pnand %p512, %p513
      %p515 = pneg %p514
      // Predicated region
      $region69: #{tpu_custom_call.1} parent=5 // pred_check
        _
      $region70: #{tpu_custom_call.1} parent=5 // pred_check_branch
        %517 = sbr.rel (%p514) target = $region72
      $region71: #{tpu_custom_call.1} parent=5 // pred_region
        %s518 = ssub.s32 %s31, 1
        %s519 = sand.u32 %s44, 1
        %s520 = scalar_lea.sflag [#allocation4], %s519
        %s521 = sand.u32 %s44, 1
        %s522 = smul.addr %s521, 8
        %s523 = scalar_lea.vmem [#allocation3], %s522
        // Predicated region
        $region73: #{tpu_custom_call.1} parent=71 // pred_check
          %p524 = pneg %p57
        $region74: #{tpu_custom_call.1} parent=71 // pred_check_branch
          %526 = sbr.rel (%p524) target = $region76
        $region75: #{tpu_custom_call.1} parent=71 // pred_region
          %527 = dma.done %s520, 128
        $region76: #{tpu_custom_call.1} parent=71 // pred_fallthru
          _
        // Predicated region
        $region77: #{tpu_custom_call.1} parent=71 // pred_check
          %p528 = pneg %p78
        $region78: #{tpu_custom_call.1} parent=71 // pred_check_branch
          %530 = sbr.rel (%p528) target = $region80
        $region79: #{tpu_custom_call.1} parent=71 // pred_region
          %531 = dma.done [#allocation7], 16
        $region80: #{tpu_custom_call.1} parent=71 // pred_fallthru
          _
        // Predicated region
        $region81: #{tpu_custom_call.1} parent=71 // pred_check
          %p532 = pneg %p99
        $region82: #{tpu_custom_call.1} parent=71 // pred_check_branch
          %534 = sbr.rel (%p532) target = $region84
        $region83: #{tpu_custom_call.1} parent=71 // pred_region
          %535 = dma.done [#allocation7], 16
        $region84: #{tpu_custom_call.1} parent=71 // pred_fallthru
          _
        // Predicated region
        $region85: #{tpu_custom_call.1} parent=71 // pred_check
          %p536 = pneg %p120
        $region86: #{tpu_custom_call.1} parent=71 // pred_check_branch
          %538 = sbr.rel (%p536) target = $region88
        $region87: #{tpu_custom_call.1} parent=71 // pred_region
          %539 = dma.done [#allocation10], 256
        $region88: #{tpu_custom_call.1} parent=71 // pred_fallthru
          _
        // Predicated region
        $region89: #{tpu_custom_call.1} parent=71 // pred_check
          %p540 = pneg %p141
        $region90: #{tpu_custom_call.1} parent=71 // pred_check_branch
          %542 = sbr.rel (%p540) target = $region92
        $region91: #{tpu_custom_call.1} parent=71 // pred_region
          %543 = dma.done [#allocation10], 16
        $region92: #{tpu_custom_call.1} parent=71 // pred_fallthru
          _
        // Predicated region
        $region93: #{tpu_custom_call.1} parent=71 // pred_check
          %p544 = pneg %p162
        $region94: #{tpu_custom_call.1} parent=71 // pred_check_branch
          %546 = sbr.rel (%p544) target = $region96
        $region95: #{tpu_custom_call.1} parent=71 // pred_region
          %547 = dma.done [#allocation13], 256
        $region96: #{tpu_custom_call.1} parent=71 // pred_fallthru
          _
        // Predicated region
        $region97: #{tpu_custom_call.1} parent=71 // pred_check
          %p548 = pneg %p183
        $region98: #{tpu_custom_call.1} parent=71 // pred_check_branch
          %550 = sbr.rel (%p548) target = $region100
        $region99: #{tpu_custom_call.1} parent=71 // pred_region
          %551 = dma.done [#allocation13], 16
        $region100: #{tpu_custom_call.1} parent=71 // pred_fallthru
          _
        // Predicated region
        $region101: #{tpu_custom_call.1} parent=71 // pred_check
          %p552 = pneg %p204
        $region102: #{tpu_custom_call.1} parent=71 // pred_check_branch
          %554 = sbr.rel (%p552) target = $region104
        $region103: #{tpu_custom_call.1} parent=71 // pred_region
          %555 = dma.done [#allocation16], 16
        $region104: #{tpu_custom_call.1} parent=71 // pred_fallthru
          _
        // Predicated region
        $region105: #{tpu_custom_call.1} parent=71 // pred_check
          %p556 = pneg %p225
        $region106: #{tpu_custom_call.1} parent=71 // pred_check_branch
          %558 = sbr.rel (%p556) target = $region108
        $region107: #{tpu_custom_call.1} parent=71 // pred_region
          %559 = dma.done [#allocation16], 16
        $region108: #{tpu_custom_call.1} parent=71 // pred_fallthru
          _
        // Predicated region
        $region109: #{tpu_custom_call.1} parent=71 // pred_check
          %p560 = pneg %p246
        $region110: #{tpu_custom_call.1} parent=71 // pred_check_branch
          %562 = sbr.rel (%p560) target = $region112
        $region111: #{tpu_custom_call.1} parent=71 // pred_region
          %563 = dma.done [#allocation19], 256
        $region112: #{tpu_custom_call.1} parent=71 // pred_fallthru
          _
        // Predicated region
        $region113: #{tpu_custom_call.1} parent=71 // pred_check
          %p564 = pneg %p267
        $region114: #{tpu_custom_call.1} parent=71 // pred_check_branch
          %566 = sbr.rel (%p564) target = $region116
        $region115: #{tpu_custom_call.1} parent=71 // pred_region
          %567 = dma.done [#allocation19], 16
        $region116: #{tpu_custom_call.1} parent=71 // pred_fallthru
          _
        // Predicated region
        $region117: #{tpu_custom_call.1} parent=71 // pred_check
          %p568 = pneg %p288
        $region118: #{tpu_custom_call.1} parent=71 // pred_check_branch
          %570 = sbr.rel (%p568) target = $region120
        $region119: #{tpu_custom_call.1} parent=71 // pred_region
          %571 = dma.done [#allocation22], 1024
        $region120: #{tpu_custom_call.1} parent=71 // pred_fallthru
          _
        // Predicated region
        $region121: #{tpu_custom_call.1} parent=71 // pred_check
          %p572 = pneg %p309
        $region122: #{tpu_custom_call.1} parent=71 // pred_check_branch
          %574 = sbr.rel (%p572) target = $region124
        $region123: #{tpu_custom_call.1} parent=71 // pred_region
          %575 = dma.done [#allocation22], 16
        $region124: #{tpu_custom_call.1} parent=71 // pred_fallthru
          _
        %s576 = sand.u32 %s44, 1
        %s577 = scalar_lea.sflag [#allocation4], %s576
        %s578 = sand.u32 %s44, 1
        %s579 = smul.addr %s578, 8
        %s580 = scalar_lea.vmem [#allocation3], %s579
        %p581 = pneg %p57
        %p582 = pneg %p54
        %p583 = pneg %p78
        %p584 = pneg %p75
        %p585 = pneg %p99
        %p586 = pneg %p96
        %p587 = pneg %p120
        %p588 = pneg %p117
        %p589 = pneg %p141
        %p590 = pneg %p138
        %p591 = pneg %p162
        %p592 = pneg %p159
        %p593 = pneg %p183
        %p594 = pneg %p180
        %p595 = pneg %p204
        %p596 = pneg %p201
        %p597 = pneg %p225
        %p598 = pneg %p222
        %p599 = pneg %p246
        %p600 = pneg %p243
        %p601 = pneg %p267
        %p602 = pneg %p264
        %p603 = pneg %p288
        %p604 = pneg %p285
        %p605 = pneg %p309
        %p606 = pneg %p306
        %p607 = pneg %p335
        %p608 = pneg %p332
        %s609 = sand.u32 %s322, 1
        %s610 = scalar_lea.sflag [#allocation5], %s609
        %s611 = sand.u32 %s322, 1
        %s612 = smul.addr %s611, 8
        %s613 = scalar_lea.vmem [#allocation24], %s612
        %v615 = vld [vmem:[%s523] sm:$0xff]
        %vm616 = vcmask 261120
        %v617 = vsel %vm616, %v615, 0.0
        %618 = vadd.xlane.f32.xlu0 %v617
        %v619 = vpop.xlane.xlu0 %618
        %v620 = vrcp.pop 32.0
        %v621 = vmul.f32 %v619, %v620
        %v622 = vsub.f32 %v615, %v621
        %v623 = vmul.f32 %v622, %v622
        %v624 = vsel %vm616, %v623, 0.0
        %625 = vadd.xlane.f32.xlu0 %v624
        %v626 = vpop.xlane.xlu0 %625
        %v627 = vmul.f32 %v626, %v620
        %v628 = vadd.f32 %v627, 1e-05
        %v629 = vrsqrt.pop %v628
        %v630 = vmul.f32 %v622, %v629
        %v631 = vld [vmem:[#allocation6] sm:$0x1]
        %v633 = vlaneseq
        %v634 = vshrl.u32 %v633, 7
        %v635 = vsub.s32 0, %v634
        %v636 = vrot.slane %v631, %v635
        %v638 = vmul.f32 %v630, %v636
        %v639 = vld [vmem:[#allocation8] sm:$0x1]
        %v641 = vlaneseq
        %v642 = vshrl.u32 %v641, 7
        %v643 = vsub.s32 0, %v642
        %v644 = vrot.slane %v639, %v643
        %v646 = vadd.f32 %v638, %v644
        %v647 = vpack.c.bf16 %v646, %v646
        %v648 = vld [vmem:[#allocation9] sm:$0xf]
        %v649 = vld [vmem:[#allocation9 + $0x4] sm:$0xf]
        %v650 = vld [vmem:[#allocation9 + $0x8] sm:$0xf]
        %v651 = vld [vmem:[#allocation9 + $0xc] sm:$0xf]
        %v652 = vld [vmem:[#allocation11] sm:$0x1]
        %v654 = vlaneseq
        %v655 = vshrl.u32 %v654, 7
        %v656 = vsub.s32 0, %v655
        %v657 = vrot.slane %v652, %v656
        %v663 = vunpack.c.l.b16 %v648
        %v664 = vunpack.c.l.b16 %v649
        %v665 = vunpack.c.l.b16 %v650
        %v666 = vunpack.c.l.b16 %v651
        %v667 = vpack.c.b16 %v664, %v663
        %v668 = vpack.c.b16 %v666, %v665
        %v672 = vsel %vm616, %v647, 0
        %674 = vmatprep.subr.bf16.mxu0 0
        %675 = vmatpush1.bf16.msra.mxu0 %v667
        %676 = vmatprep.subr.bf16.mxu0 0
        %677 = vmatpush1.bf16.msra.mxu0 %v668
        %678 = vmatprep.subr.bf16.mxu0 0
        %679 = vmatpush1.bf16.msra.mxu0 0
        %680 = vmatprep.subr.bf16.mxu0 0
        %681 = vmatpush1.bf16.msra.mxu0 0
        %682 = vmatprep.subr.bf16.mxu0 0
        %683 = vmatpush1.bf16.msra.mxu0 0
        %684 = vmatprep.subr.bf16.mxu0 0
        %685 = vmatpush1.bf16.msra.mxu0 0
        %686 = vmatprep.subr.bf16.mxu0 0
        %687 = vmatpush1.bf16.msra.mxu0 0
        %688 = vmatprep.subr.bf16.mxu0 0
        %689 = vmatpush1.bf16.msra.mxu0 0
        %690 = vmatprep.subr.bf16.mxu0 0
        %691 = vmatpush1.bf16.msra.mxu0 0
        %692 = vmatprep.subr.bf16.mxu0 0
        %693 = vmatpush1.bf16.msra.mxu0 0
        %694 = vmatprep.subr.bf16.mxu0 0
        %695 = vmatpush1.bf16.msra.mxu0 0
        %696 = vmatprep.subr.bf16.mxu0 0
        %697 = vmatpush1.bf16.msra.mxu0 0
        %698 = vmatprep.subr.bf16.mxu0 0
        %699 = vmatpush1.bf16.msra.mxu0 0
        %700 = vmatprep.subr.bf16.mxu0 0
        %701 = vmatpush1.bf16.msra.mxu0 0
        %702 = vmatprep.subr.bf16.mxu0 0
        %703 = vmatpush1.bf16.msra.mxu0 0
        %704 = vmatprep.subr.bf16.mxu0 0
        %705 = vmatpush1.bf16.msra.mxu0 0
        %706 = vmatprep.mubr.bf16.mxu0 0
        %707 = vmatmul.mubr.bf16.gmra.mrb[0].mxu0 %v672
        %v708 = vpop.f32.mrb[0].mxu0
        %v709 = vadd.f32 %v657, %v708
        %v710 = vpop.f32.mrb[0].mxu0
        %v711 = vpop.f32.mrb[0].mxu0
        %v712 = vpop.f32.mrb[0].mxu0
        %713 = vdwg.mxu0
        %v714 = vpack.c.bf16 %v709, %v709
        %716 = vrot.lane.b32.xlu0 %v714, 96
        %v717 = vpop.permute.xlu0 %716
        %vm718 = vcmask 64512
        %v720 = vsel %vm718, %v714, 0
        %v723 = vsel %vm718, %v717, 0
        %725 = vmatprep.subr.bf16.mxu0 0
        %726 = vmatpush1.bf16.xpose.msra.mxu0 %v723
        %727 = vmatprep.subr.bf16.mxu0 0
        %728 = vmatpush1.bf16.xpose.msra.mxu0 0
        %729 = vmatprep.subr.bf16.mxu0 0
        %730 = vmatpush1.bf16.xpose.msra.mxu0 0
        %731 = vmatprep.subr.bf16.mxu0 0
        %732 = vmatpush1.bf16.xpose.msra.mxu0 0
        %733 = vmatprep.subr.bf16.mxu0 0
        %734 = vmatpush1.bf16.xpose.msra.mxu0 0
        %735 = vmatprep.subr.bf16.mxu0 0
        %736 = vmatpush1.bf16.xpose.msra.mxu0 0
        %737 = vmatprep.subr.bf16.mxu0 0
        %738 = vmatpush1.bf16.xpose.msra.mxu0 0
        %739 = vmatprep.subr.bf16.mxu0 0
        %740 = vmatpush1.bf16.xpose.msra.mxu0 0
        %741 = vmatprep.subr.bf16.mxu0 0
        %742 = vmatpush1.bf16.xpose.msra.mxu0 0
        %743 = vmatprep.subr.bf16.mxu0 0
        %744 = vmatpush1.bf16.xpose.msra.mxu0 0
        %745 = vmatprep.subr.bf16.mxu0 0
        %746 = vmatpush1.bf16.xpose.msra.mxu0 0
        %747 = vmatprep.subr.bf16.mxu0 0
        %748 = vmatpush1.bf16.xpose.msra.mxu0 0
        %749 = vmatprep.subr.bf16.mxu0 0
        %750 = vmatpush1.bf16.xpose.msra.mxu0 0
        %751 = vmatprep.subr.bf16.mxu0 0
        %752 = vmatpush1.bf16.xpose.msra.mxu0 0
        %753 = vmatprep.subr.bf16.mxu0 0
        %754 = vmatpush1.bf16.xpose.msra.mxu0 0
        %755 = vmatprep.subr.bf16.mxu0 0
        %756 = vmatpush1.bf16.xpose.msra.mxu0 0
        %757 = vmatprep.mubr.bf16.mxu0 0
        %758 = vmatmul.mubr.bf16.gmra.mrb[0].mxu0 %v720
        %v759 = vpop.f32.mrb[0].mxu0
        %v760 = vadd.f32 0.0, %v759
        %v761 = vpop.f32.mrb[0].mxu0
        %v762 = vpop.f32.mrb[0].mxu0
        %v763 = vpop.f32.mrb[0].mxu0
        %764 = vdwg.mxu0
        %v765 = vmul.f32 %v760, 0.17677669
        %v766 = vsel %vm718, %v765, -inf
        %767 = vmax.xlane.f32.xlu0 %v766
        %v768 = vpop.xlane.xlu0 %767
        %v769 = vsub.f32 %v765, %v768
        %v770 = vmul.f32 %v769, 1.442695
        %v771 = vpow.pop %v770
        %v772 = vsel %vm718, %v771, 0.0
        %773 = vadd.xlane.f32.xlu0 %v772
        %v774 = vpop.xlane.xlu0 %773
        %v775 = vrcp.pop %v774
        %v776 = vmul.f32 %v771, %v775
        %v777 = vpack.c.bf16 %v776, %v776
        %778 = vrot.lane.b32.xlu0 %v714, 64
        %v779 = vpop.permute.xlu0 %778
        %v781 = vsel %vm718, %v777, 0
        %vm783 = vcmask 1043456
        %v785 = vsel %vm783, %v779, 0
        %787 = vmatprep.subr.bf16.mxu0 0
        %788 = vmatpush1.bf16.msra.mxu0 %v785
        %789 = vmatprep.subr.bf16.mxu0 0
        %790 = vmatpush1.bf16.msra.mxu0 0
        %791 = vmatprep.subr.bf16.mxu0 0
        %792 = vmatpush1.bf16.msra.mxu0 0
        %793 = vmatprep.subr.bf16.mxu0 0
        %794 = vmatpush1.bf16.msra.mxu0 0
        %795 = vmatprep.subr.bf16.mxu0 0
        %796 = vmatpush1.bf16.msra.mxu0 0
        %797 = vmatprep.subr.bf16.mxu0 0
        %798 = vmatpush1.bf16.msra.mxu0 0
        %799 = vmatprep.subr.bf16.mxu0 0
        %800 = vmatpush1.bf16.msra.mxu0 0
        %801 = vmatprep.subr.bf16.mxu0 0
        %802 = vmatpush1.bf16.msra.mxu0 0
        %803 = vmatprep.subr.bf16.mxu0 0
        %804 = vmatpush1.bf16.msra.mxu0 0
        %805 = vmatprep.subr.bf16.mxu0 0
        %806 = vmatpush1.bf16.msra.mxu0 0
        %807 = vmatprep.subr.bf16.mxu0 0
        %808 = vmatpush1.bf16.msra.mxu0 0
        %809 = vmatprep.subr.bf16.mxu0 0
        %810 = vmatpush1.bf16.msra.mxu0 0
        %811 = vmatprep.subr.bf16.mxu0 0
        %812 = vmatpush1.bf16.msra.mxu0 0
        %813 = vmatprep.subr.bf16.mxu0 0
        %814 = vmatpush1.bf16.msra.mxu0 0
        %815 = vmatprep.subr.bf16.mxu0 0
        %816 = vmatpush1.bf16.msra.mxu0 0
        %817 = vmatprep.subr.bf16.mxu0 0
        %818 = vmatpush1.bf16.msra.mxu0 0
        %819 = vmatprep.mubr.bf16.mxu0 0
        %820 = vmatmul.mubr.bf16.gmra.mrb[0].mxu0 %v781
        %v821 = vpop.f32.mrb[0].mxu0
        %v822 = vadd.f32 0.0, %v821
        %v823 = vpop.f32.mrb[0].mxu0
        %v824 = vpop.f32.mrb[0].mxu0
        %v825 = vpop.f32.mrb[0].mxu0
        %826 = vdwg.mxu0
        %827 = vst.msk [vmem:[#allocation2] sm:$0xff] %vm718, %v822
        %828 = vrot.lane.b32.xlu0 %v714, 120
        %v829 = vpop.permute.xlu0 %828
        %830 = vrot.lane.b32.xlu0 %v714, 88
        %v831 = vpop.permute.xlu0 %830
        %v833 = vsel %vm718, %v829, 0
        %v836 = vsel %vm718, %v831, 0
        %838 = vmatprep.subr.bf16.mxu0 0
        %839 = vmatpush1.bf16.xpose.msra.mxu0 %v836
        %840 = vmatprep.subr.bf16.mxu0 0
        %841 = vmatpush1.bf16.xpose.msra.mxu0 0
        %842 = vmatprep.subr.bf16.mxu0 0
        %843 = vmatpush1.bf16.xpose.msra.mxu0 0
        %844 = vmatprep.subr.bf16.mxu0 0
        %845 = vmatpush1.bf16.xpose.msra.mxu0 0
        %846 = vmatprep.subr.bf16.mxu0 0
        %847 = vmatpush1.bf16.xpose.msra.mxu0 0
        %848 = vmatprep.subr.bf16.mxu0 0
        %849 = vmatpush1.bf16.xpose.msra.mxu0 0
        %850 = vmatprep.subr.bf16.mxu0 0
        %851 = vmatpush1.bf16.xpose.msra.mxu0 0
        %852 = vmatprep.subr.bf16.mxu0 0
        %853 = vmatpush1.bf16.xpose.msra.mxu0 0
        %854 = vmatprep.subr.bf16.mxu0 0
        %855 = vmatpush1.bf16.xpose.msra.mxu0 0
        %856 = vmatprep.subr.bf16.mxu0 0
        %857 = vmatpush1.bf16.xpose.msra.mxu0 0
        %858 = vmatprep.subr.bf16.mxu0 0
        %859 = vmatpush1.bf16.xpose.msra.mxu0 0
        %860 = vmatprep.subr.bf16.mxu0 0
        %861 = vmatpush1.bf16.xpose.msra.mxu0 0
        %862 = vmatprep.subr.bf16.mxu0 0
        %863 = vmatpush1.bf16.xpose.msra.mxu0 0
        %864 = vmatprep.subr.bf16.mxu0 0
        %865 = vmatpush1.bf16.xpose.msra.mxu0 0
        %866 = vmatprep.subr.bf16.mxu0 0
        %867 = vmatpush1.bf16.xpose.msra.mxu0 0
        %868 = vmatprep.subr.bf16.mxu0 0
        %869 = vmatpush1.bf16.xpose.msra.mxu0 0
        %870 = vmatprep.mubr.bf16.mxu0 0
        %871 = vmatmul.mubr.bf16.gmra.mrb[0].mxu0 %v833
        %v872 = vpop.f32.mrb[0].mxu0
        %v873 = vadd.f32 0.0, %v872
        %v874 = vpop.f32.mrb[0].mxu0
        %v875 = vpop.f32.mrb[0].mxu0
        %v876 = vpop.f32.mrb[0].mxu0
        %877 = vdwg.mxu0
        %v878 = vmul.f32 %v873, 0.17677669
        %v879 = vsel %vm718, %v878, -inf
        %880 = vmax.xlane.f32.xlu0 %v879
        %v881 = vpop.xlane.xlu0 %880
        %v882 = vsub.f32 %v878, %v881
        %v883 = vmul.f32 %v882, 1.442695
        %v884 = vpow.pop %v883
        %v885 = vsel %vm718, %v884, 0.0
        %886 = vadd.xlane.f32.xlu0 %v885
        %v887 = vpop.xlane.xlu0 %886
        %v888 = vrcp.pop %v887
        %v889 = vmul.f32 %v884, %v888
        %v890 = vpack.c.bf16 %v889, %v889
        %891 = vrot.lane.b32.xlu0 %v714, 56
        %v892 = vpop.permute.xlu0 %891
        %v894 = vsel %vm718, %v890, 0
        %v897 = vsel %vm783, %v892, 0
        %899 = vmatprep.subr.bf16.mxu0 0
        %900 = vmatpush1.bf16.msra.mxu0 %v897
        %901 = vmatprep.subr.bf16.mxu0 0
        %902 = vmatpush1.bf16.msra.mxu0 0
        %903 = vmatprep.subr.bf16.mxu0 0
        %904 = vmatpush1.bf16.msra.mxu0 0
        %905 = vmatprep.subr.bf16.mxu0 0
        %906 = vmatpush1.bf16.msra.mxu0 0
        %907 = vmatprep.subr.bf16.mxu0 0
        %908 = vmatpush1.bf16.msra.mxu0 0
        %909 = vmatprep.subr.bf16.mxu0 0
        %910 = vmatpush1.bf16.msra.mxu0 0
        %911 = vmatprep.subr.bf16.mxu0 0
        %912 = vmatpush1.bf16.msra.mxu0 0
        %913 = vmatprep.subr.bf16.mxu0 0
        %914 = vmatpush1.bf16.msra.mxu0 0
        %915 = vmatprep.subr.bf16.mxu0 0
        %916 = vmatpush1.bf16.msra.mxu0 0
        %917 = vmatprep.subr.bf16.mxu0 0
        %918 = vmatpush1.bf16.msra.mxu0 0
        %919 = vmatprep.subr.bf16.mxu0 0
        %920 = vmatpush1.bf16.msra.mxu0 0
        %921 = vmatprep.subr.bf16.mxu0 0
        %922 = vmatpush1.bf16.msra.mxu0 0
        %923 = vmatprep.subr.bf16.mxu0 0
        %924 = vmatpush1.bf16.msra.mxu0 0
        %925 = vmatprep.subr.bf16.mxu0 0
        %926 = vmatpush1.bf16.msra.mxu0 0
        %927 = vmatprep.subr.bf16.mxu0 0
        %928 = vmatpush1.bf16.msra.mxu0 0
        %929 = vmatprep.subr.bf16.mxu0 0
        %930 = vmatpush1.bf16.msra.mxu0 0
        %931 = vmatprep.mubr.bf16.mxu0 0
        %932 = vmatmul.mubr.bf16.gmra.mrb[0].mxu0 %v894
        %v933 = vpop.f32.mrb[0].mxu0
        %v934 = vadd.f32 0.0, %v933
        %v935 = vpop.f32.mrb[0].mxu0
        %v936 = vpop.f32.mrb[0].mxu0
        %v937 = vpop.f32.mrb[0].mxu0
        %938 = vdwg.mxu0
        %940 = vrot.lane.b32.xlu0 %v934, 8
        %v941 = vpop.permute.xlu0 %940
        %vm943 = vcmask 130112
        %944 = vst.msk [vmem:[#allocation2] sm:$0xff] %vm943, %v941
        %945 = vrot.lane.b32.xlu0 %v714, 112
        %v946 = vpop.permute.xlu0 %945
        %947 = vrot.lane.b32.xlu0 %v714, 80
        %v948 = vpop.permute.xlu0 %947
        %v950 = vsel %vm718, %v946, 0
        %v953 = vsel %vm718, %v948, 0
        %955 = vmatprep.subr.bf16.mxu0 0
        %956 = vmatpush1.bf16.xpose.msra.mxu0 %v953
        %957 = vmatprep.subr.bf16.mxu0 0
        %958 = vmatpush1.bf16.xpose.msra.mxu0 0
        %959 = vmatprep.subr.bf16.mxu0 0
        %960 = vmatpush1.bf16.xpose.msra.mxu0 0
        %961 = vmatprep.subr.bf16.mxu0 0
        %962 = vmatpush1.bf16.xpose.msra.mxu0 0
        %963 = vmatprep.subr.bf16.mxu0 0
        %964 = vmatpush1.bf16.xpose.msra.mxu0 0
        %965 = vmatprep.subr.bf16.mxu0 0
        %966 = vmatpush1.bf16.xpose.msra.mxu0 0
        %967 = vmatprep.subr.bf16.mxu0 0
        %968 = vmatpush1.bf16.xpose.msra.mxu0 0
        %969 = vmatprep.subr.bf16.mxu0 0
        %970 = vmatpush1.bf16.xpose.msra.mxu0 0
        %971 = vmatprep.subr.bf16.mxu0 0
        %972 = vmatpush1.bf16.xpose.msra.mxu0 0
        %973 = vmatprep.subr.bf16.mxu0 0
        %974 = vmatpush1.bf16.xpose.msra.mxu0 0
        %975 = vmatprep.subr.bf16.mxu0 0
        %976 = vmatpush1.bf16.xpose.msra.mxu0 0
        %977 = vmatprep.subr.bf16.mxu0 0
        %978 = vmatpush1.bf16.xpose.msra.mxu0 0
        %979 = vmatprep.subr.bf16.mxu0 0
        %980 = vmatpush1.bf16.xpose.msra.mxu0 0
        %981 = vmatprep.subr.bf16.mxu0 0
        %982 = vmatpush1.bf16.xpose.msra.mxu0 0
        %983 = vmatprep.subr.bf16.mxu0 0
        %984 = vmatpush1.bf16.xpose.msra.mxu0 0
        %985 = vmatprep.subr.bf16.mxu0 0
        %986 = vmatpush1.bf16.xpose.msra.mxu0 0
        %987 = vmatprep.mubr.bf16.mxu0 0
        %988 = vmatmul.mubr.bf16.gmra.mrb[0].mxu0 %v950
        %v989 = vpop.f32.mrb[0].mxu0
        %v990 = vadd.f32 0.0, %v989
        %v991 = vpop.f32.mrb[0].mxu0
        %v992 = vpop.f32.mrb[0].mxu0
        %v993 = vpop.f32.mrb[0].mxu0
        %994 = vdwg.mxu0
        %v995 = vmul.f32 %v990, 0.17677669
        %v996 = vsel %vm718, %v995, -inf
        %997 = vmax.xlane.f32.xlu0 %v996
        %v998 = vpop.xlane.xlu0 %997
        %v999 = vsub.f32 %v995, %v998
        %v1000 = vmul.f32 %v999, 1.442695
        %v1001 = vpow.pop %v1000
        %v1002 = vsel %vm718, %v1001, 0.0
        %1003 = vadd.xlane.f32.xlu0 %v1002
        %v1004 = vpop.xlane.xlu0 %1003
        %v1005 = vrcp.pop %v1004
        %v1006 = vmul.f32 %v1001, %v1005
        %v1007 = vpack.c.bf16 %v1006, %v1006
        %1008 = vrot.lane.b32.xlu0 %v714, 48
        %v1009 = vpop.permute.xlu0 %1008
        %v1011 = vsel %vm718, %v1007, 0
        %v1014 = vsel %vm783, %v1009, 0
        %1016 = vmatprep.subr.bf16.mxu0 0
        %1017 = vmatpush1.bf16.msra.mxu0 %v1014
        %1018 = vmatprep.subr.bf16.mxu0 0
        %1019 = vmatpush1.bf16.msra.mxu0 0
        %1020 = vmatprep.subr.bf16.mxu0 0
        %1021 = vmatpush1.bf16.msra.mxu0 0
        %1022 = vmatprep.subr.bf16.mxu0 0
        %1023 = vmatpush1.bf16.msra.mxu0 0
        %1024 = vmatprep.subr.bf16.mxu0 0
        %1025 = vmatpush1.bf16.msra.mxu0 0
        %1026 = vmatprep.subr.bf16.mxu0 0
        %1027 = vmatpush1.bf16.msra.mxu0 0
        %1028 = vmatprep.subr.bf16.mxu0 0
        %1029 = vmatpush1.bf16.msra.mxu0 0
        %1030 = vmatprep.subr.bf16.mxu0 0
        %1031 = vmatpush1.bf16.msra.mxu0 0
        %1032 = vmatprep.subr.bf16.mxu0 0
        %1033 = vmatpush1.bf16.msra.mxu0 0
        %1034 = vmatprep.subr.bf16.mxu0 0
        %1035 = vmatpush1.bf16.msra.mxu0 0
        %1036 = vmatprep.subr.bf16.mxu0 0
        %1037 = vmatpush1.bf16.msra.mxu0 0
        %1038 = vmatprep.subr.bf16.mxu0 0
        %1039 = vmatpush1.bf16.msra.mxu0 0
        %1040 = vmatprep.subr.bf16.mxu0 0
        %1041 = vmatpush1.bf16.msra.mxu0 0
        %1042 = vmatprep.subr.bf16.mxu0 0
        %1043 = vmatpush1.bf16.msra.mxu0 0
        %1044 = vmatprep.subr.bf16.mxu0 0
        %1045 = vmatpush1.bf16.msra.mxu0 0
        %1046 = vmatprep.subr.bf16.mxu0 0
        %1047 = vmatpush1.bf16.msra.mxu0 0
        %1048 = vmatprep.mubr.bf16.mxu0 0
        %1049 = vmatmul.mubr.bf16.gmra.mrb[0].mxu0 %v1011
        %v1050 = vpop.f32.mrb[0].mxu0
        %v1051 = vadd.f32 0.0, %v1050
        %v1052 = vpop.f32.mrb[0].mxu0
        %v1053 = vpop.f32.mrb[0].mxu0
        %v1054 = vpop.f32.mrb[0].mxu0
        %1055 = vdwg.mxu0
        %1057 = vrot.lane.b32.xlu0 %v1051, 16
        %v1058 = vpop.permute.xlu0 %1057
        %vm1060 = vcmask 195712
        %1061 = vst.msk [vmem:[#allocation2] sm:$0xff] %vm1060, %v1058
        %1062 = vrot.lane.b32.xlu0 %v714, 104
        %v1063 = vpop.permute.xlu0 %1062
        %1064 = vrot.lane.b32.xlu0 %v714, 72
        %v1065 = vpop.permute.xlu0 %1064
        %v1067 = vsel %vm718, %v1063, 0
        %v1070 = vsel %vm718, %v1065, 0
        %1072 = vmatprep.subr.bf16.mxu0 0
        %1073 = vmatpush1.bf16.xpose.msra.mxu0 %v1070
        %1074 = vmatprep.subr.bf16.mxu0 0
        %1075 = vmatpush1.bf16.xpose.msra.mxu0 0
        %1076 = vmatprep.subr.bf16.mxu0 0
        %1077 = vmatpush1.bf16.xpose.msra.mxu0 0
        %1078 = vmatprep.subr.bf16.mxu0 0
        %1079 = vmatpush1.bf16.xpose.msra.mxu0 0
        %1080 = vmatprep.subr.bf16.mxu0 0
        %1081 = vmatpush1.bf16.xpose.msra.mxu0 0
        %1082 = vmatprep.subr.bf16.mxu0 0
        %1083 = vmatpush1.bf16.xpose.msra.mxu0 0
        %1084 = vmatprep.subr.bf16.mxu0 0
        %1085 = vmatpush1.bf16.xpose.msra.mxu0 0
        %1086 = vmatprep.subr.bf16.mxu0 0
        %1087 = vmatpush1.bf16.xpose.msra.mxu0 0
        %1088 = vmatprep.subr.bf16.mxu0 0
        %1089 = vmatpush1.bf16.xpose.msra.mxu0 0
        %1090 = vmatprep.subr.bf16.mxu0 0
        %1091 = vmatpush1.bf16.xpose.msra.mxu0 0
        %1092 = vmatprep.subr.bf16.mxu0 0
        %1093 = vmatpush1.bf16.xpose.msra.mxu0 0
        %1094 = vmatprep.subr.bf16.mxu0 0
        %1095 = vmatpush1.bf16.xpose.msra.mxu0 0
        %1096 = vmatprep.subr.bf16.mxu0 0
        %1097 = vmatpush1.bf16.xpose.msra.mxu0 0
        %1098 = vmatprep.subr.bf16.mxu0 0
        %1099 = vmatpush1.bf16.xpose.msra.mxu0 0
        %1100 = vmatprep.subr.bf16.mxu0 0
        %1101 = vmatpush1.bf16.xpose.msra.mxu0 0
        %1102 = vmatprep.subr.bf16.mxu0 0
        %1103 = vmatpush1.bf16.xpose.msra.mxu0 0
        %1104 = vmatprep.mubr.bf16.mxu0 0
        %1105 = vmatmul.mubr.bf16.gmra.mrb[0].mxu0 %v1067
        %v1106 = vpop.f32.mrb[0].mxu0
        %v1107 = vadd.f32 0.0, %v1106
        %v1108 = vpop.f32.mrb[0].mxu0
        %v1109 = vpop.f32.mrb[0].mxu0
        %v1110 = vpop.f32.mrb[0].mxu0
        %1111 = vdwg.mxu0
        %v1112 = vmul.f32 %v1107, 0.17677669
        %v1113 = vsel %vm718, %v1112, -inf
        %1114 = vmax.xlane.f32.xlu0 %v1113
        %v1115 = vpop.xlane.xlu0 %1114
        %v1116 = vsub.f32 %v1112, %v1115
        %v1117 = vmul.f32 %v1116, 1.442695
        %v1118 = vpow.pop %v1117
        %v1119 = vsel %vm718, %v1118, 0.0
        %1120 = vadd.xlane.f32.xlu0 %v1119
        %v1121 = vpop.xlane.xlu0 %1120
        %v1122 = vrcp.pop %v1121
        %v1123 = vmul.f32 %v1118, %v1122
        %v1124 = vpack.c.bf16 %v1123, %v1123
        %1125 = vrot.lane.b32.xlu0 %v714, 40
        %v1126 = vpop.permute.xlu0 %1125
        %v1128 = vsel %vm718, %v1124, 0
        %v1131 = vsel %vm783, %v1126, 0
        %1133 = vmatprep.subr.bf16.mxu0 0
        %1134 = vmatpush1.bf16.msra.mxu0 %v1131
        %1135 = vmatprep.subr.bf16.mxu0 0
        %1136 = vmatpush1.bf16.msra.mxu0 0
        %1137 = vmatprep.subr.bf16.mxu0 0
        %1138 = vmatpush1.bf16.msra.mxu0 0
        %1139 = vmatprep.subr.bf16.mxu0 0
        %1140 = vmatpush1.bf16.msra.mxu0 0
        %1141 = vmatprep.subr.bf16.mxu0 0
        %1142 = vmatpush1.bf16.msra.mxu0 0
        %1143 = vmatprep.subr.bf16.mxu0 0
        %1144 = vmatpush1.bf16.msra.mxu0 0
        %1145 = vmatprep.subr.bf16.mxu0 0
        %1146 = vmatpush1.bf16.msra.mxu0 0
        %1147 = vmatprep.subr.bf16.mxu0 0
        %1148 = vmatpush1.bf16.msra.mxu0 0
        %1149 = vmatprep.subr.bf16.mxu0 0
        %1150 = vmatpush1.bf16.msra.mxu0 0
        %1151 = vmatprep.subr.bf16.mxu0 0
        %1152 = vmatpush1.bf16.msra.mxu0 0
        %1153 = vmatprep.subr.bf16.mxu0 0
        %1154 = vmatpush1.bf16.msra.mxu0 0
        %1155 = vmatprep.subr.bf16.mxu0 0
        %1156 = vmatpush1.bf16.msra.mxu0 0
        %1157 = vmatprep.subr.bf16.mxu0 0
        %1158 = vmatpush1.bf16.msra.mxu0 0
        %1159 = vmatprep.subr.bf16.mxu0 0
        %1160 = vmatpush1.bf16.msra.mxu0 0
        %1161 = vmatprep.subr.bf16.mxu0 0
        %1162 = vmatpush1.bf16.msra.mxu0 0
        %1163 = vmatprep.subr.bf16.mxu0 0
        %1164 = vmatpush1.bf16.msra.mxu0 0
        %1165 = vmatprep.mubr.bf16.mxu0 0
        %1166 = vmatmul.mubr.bf16.gmra.mrb[0].mxu0 %v1128
        %v1167 = vpop.f32.mrb[0].mxu0
        %v1168 = vadd.f32 0.0, %v1167
        %v1169 = vpop.f32.mrb[0].mxu0
        %v1170 = vpop.f32.mrb[0].mxu0
        %v1171 = vpop.f32.mrb[0].mxu0
        %1172 = vdwg.mxu0
        %1174 = vrot.lane.b32.xlu0 %v1168, 24
        %v1175 = vpop.permute.xlu0 %1174
        %vm1177 = vcmask 261312
        %1178 = vst.msk [vmem:[#allocation2] sm:$0xff] %vm1177, %v1175
        %v1179 = vld [vmem:[#allocation2] sm:$0xff]
        %v1180 = vpack.c.bf16 %v1179, %v1179
        %v1181 = vld [vmem:[#allocation12] sm:$0xf]
        %v1182 = vld [vmem:[#allocation12 + $0x4] sm:$0xf]
        %v1183 = vld [vmem:[#allocation12 + $0x8] sm:$0xf]
        %v1184 = vld [vmem:[#allocation12 + $0xc] sm:$0xf]
        %v1185 = vld [vmem:[#allocation14] sm:$0x1]
        %v1187 = vlaneseq
        %v1188 = vshrl.u32 %v1187, 7
        %v1189 = vsub.s32 0, %v1188
        %v1190 = vrot.slane %v1185, %v1189
        %v1196 = vunpack.c.l.b16 %v1181
        %v1197 = vunpack.c.l.b16 %v1182
        %v1198 = vunpack.c.l.b16 %v1183
        %v1199 = vunpack.c.l.b16 %v1184
        %v1200 = vpack.c.b16 %v1197, %v1196
        %v1201 = vpack.c.b16 %v1199, %v1198
        %v1205 = vsel %vm616, %v1180, 0
        %1207 = vmatprep.subr.bf16.mxu0 0
        %1208 = vmatpush1.bf16.msra.mxu0 %v1200
        %1209 = vmatprep.subr.bf16.mxu0 0
        %1210 = vmatpush1.bf16.msra.mxu0 %v1201
        %1211 = vmatprep.subr.bf16.mxu0 0
        %1212 = vmatpush1.bf16.msra.mxu0 0
        %1213 = vmatprep.subr.bf16.mxu0 0
        %1214 = vmatpush1.bf16.msra.mxu0 0
        %1215 = vmatprep.subr.bf16.mxu0 0
        %1216 = vmatpush1.bf16.msra.mxu0 0
        %1217 = vmatprep.subr.bf16.mxu0 0
        %1218 = vmatpush1.bf16.msra.mxu0 0
        %1219 = vmatprep.subr.bf16.mxu0 0
        %1220 = vmatpush1.bf16.msra.mxu0 0
        %1221 = vmatprep.subr.bf16.mxu0 0
        %1222 = vmatpush1.bf16.msra.mxu0 0
        %1223 = vmatprep.subr.bf16.mxu0 0
        %1224 = vmatpush1.bf16.msra.mxu0 0
        %1225 = vmatprep.subr.bf16.mxu0 0
        %1226 = vmatpush1.bf16.msra.mxu0 0
        %1227 = vmatprep.subr.bf16.mxu0 0
        %1228 = vmatpush1.bf16.msra.mxu0 0
        %1229 = vmatprep.subr.bf16.mxu0 0
        %1230 = vmatpush1.bf16.msra.mxu0 0
        %1231 = vmatprep.subr.bf16.mxu0 0
        %1232 = vmatpush1.bf16.msra.mxu0 0
        %1233 = vmatprep.subr.bf16.mxu0 0
        %1234 = vmatpush1.bf16.msra.mxu0 0
        %1235 = vmatprep.subr.bf16.mxu0 0
        %1236 = vmatpush1.bf16.msra.mxu0 0
        %1237 = vmatprep.subr.bf16.mxu0 0
        %1238 = vmatpush1.bf16.msra.mxu0 0
        %1239 = vmatprep.mubr.bf16.mxu0 0
        %1240 = vmatmul.mubr.bf16.gmra.mrb[0].mxu0 %v1205
        %v1241 = vpop.f32.mrb[0].mxu0
        %v1242 = vadd.f32 %v1190, %v1241
        %v1243 = vpop.f32.mrb[0].mxu0
        %v1244 = vpop.f32.mrb[0].mxu0
        %v1245 = vpop.f32.mrb[0].mxu0
        %1246 = vdwg.mxu0
        %v1247 = vadd.f32 %v615, %v1242
        %v1248 = vsel %vm616, %v1247, 0.0
        %1249 = vadd.xlane.f32.xlu0 %v1248
        %v1250 = vpop.xlane.xlu0 %1249
        %v1251 = vmul.f32 %v1250, %v620
        %v1252 = vsub.f32 %v1247, %v1251
        %v1253 = vmul.f32 %v1252, %v1252
        %v1254 = vsel %vm616, %v1253, 0.0
        %1255 = vadd.xlane.f32.xlu0 %v1254
        %v1256 = vpop.xlane.xlu0 %1255
        %v1257 = vmul.f32 %v1256, %v620
        %v1258 = vadd.f32 %v1257, 1e-05
        %v1259 = vrsqrt.pop %v1258
        %v1260 = vmul.f32 %v1252, %v1259
        %v1261 = vld [vmem:[#allocation15] sm:$0x1]
        %v1263 = vlaneseq
        %v1264 = vshrl.u32 %v1263, 7
        %v1265 = vsub.s32 0, %v1264
        %v1266 = vrot.slane %v1261, %v1265
        %v1268 = vmul.f32 %v1260, %v1266
        %v1269 = vld [vmem:[#allocation17] sm:$0x1]
        %v1271 = vlaneseq
        %v1272 = vshrl.u32 %v1271, 7
        %v1273 = vsub.s32 0, %v1272
        %v1274 = vrot.slane %v1269, %v1273
        %v1276 = vadd.f32 %v1268, %v1274
        %v1277 = vpack.c.bf16 %v1276, %v1276
        %v1278 = vld [vmem:[#allocation18] sm:$0xf]
        %v1279 = vld [vmem:[#allocation18 + $0x4] sm:$0xf]
        %v1280 = vld [vmem:[#allocation18 + $0x8] sm:$0xf]
        %v1281 = vld [vmem:[#allocation18 + $0xc] sm:$0xf]
        %v1282 = vld [vmem:[#allocation20] sm:$0x1]
        %v1284 = vlaneseq
        %v1285 = vshrl.u32 %v1284, 7
        %v1286 = vsub.s32 0, %v1285
        %v1287 = vrot.slane %v1282, %v1286
        %v1293 = vunpack.c.l.b16 %v1278
        %v1294 = vunpack.c.l.b16 %v1279
        %v1295 = vunpack.c.l.b16 %v1280
        %v1296 = vunpack.c.l.b16 %v1281
        %v1297 = vpack.c.b16 %v1294, %v1293
        %v1298 = vpack.c.b16 %v1296, %v1295
        %v1302 = vsel %vm616, %v1277, 0
        %1304 = vmatprep.subr.bf16.mxu0 0
        %1305 = vmatpush1.bf16.msra.mxu0 %v1297
        %1306 = vmatprep.subr.bf16.mxu0 0
        %1307 = vmatpush1.bf16.msra.mxu0 %v1298
        %1308 = vmatprep.subr.bf16.mxu0 0
        %1309 = vmatpush1.bf16.msra.mxu0 0
        %1310 = vmatprep.subr.bf16.mxu0 0
        %1311 = vmatpush1.bf16.msra.mxu0 0
        %1312 = vmatprep.subr.bf16.mxu0 0
        %1313 = vmatpush1.bf16.msra.mxu0 0
        %1314 = vmatprep.subr.bf16.mxu0 0
        %1315 = vmatpush1.bf16.msra.mxu0 0
        %1316 = vmatprep.subr.bf16.mxu0 0
        %1317 = vmatpush1.bf16.msra.mxu0 0
        %1318 = vmatprep.subr.bf16.mxu0 0
        %1319 = vmatpush1.bf16.msra.mxu0 0
        %1320 = vmatprep.subr.bf16.mxu0 0
        %1321 = vmatpush1.bf16.msra.mxu0 0
        %1322 = vmatprep.subr.bf16.mxu0 0
        %1323 = vmatpush1.bf16.msra.mxu0 0
        %1324 = vmatprep.subr.bf16.mxu0 0
        %1325 = vmatpush1.bf16.msra.mxu0 0
        %1326 = vmatprep.subr.bf16.mxu0 0
        %1327 = vmatpush1.bf16.msra.mxu0 0
        %1328 = vmatprep.subr.bf16.mxu0 0
        %1329 = vmatpush1.bf16.msra.mxu0 0
        %1330 = vmatprep.subr.bf16.mxu0 0
        %1331 = vmatpush1.bf16.msra.mxu0 0
        %1332 = vmatprep.subr.bf16.mxu0 0
        %1333 = vmatpush1.bf16.msra.mxu0 0
        %1334 = vmatprep.subr.bf16.mxu0 0
        %1335 = vmatpush1.bf16.msra.mxu0 0
        %1336 = vmatprep.mubr.bf16.mxu0 0
        %1337 = vmatmul.mubr.bf16.gmra.mrb[0].mxu0 %v1302
        %v1338 = vpop.f32.mrb[0].mxu0
        %v1339 = vadd.f32 %v1287, %v1338
        %v1340 = vpop.f32.mrb[0].mxu0
        %v1341 = vpop.f32.mrb[0].mxu0
        %v1342 = vpop.f32.mrb[0].mxu0
        %1343 = vdwg.mxu0
        %v1344 = vmul.f32 %v1339, 0.5
        %v1345 = vmul.f32 %v1339, 0.044715
        %v1346 = vmul.f32 %v1345, %v1339
        %v1347 = vmul.f32 %v1346, %v1339
        %v1348 = vadd.f32 %v1339, %v1347
        %v1349 = vmul.f32 %v1348, 0.7978846
        %v1350 = vtanh.pop %v1349
        %v1351 = vadd.f32 %v1350, 1.0
        %v1352 = vmul.f32 %v1344, %v1351
        %v1353 = vpack.c.bf16 %v1352, %v1352
        %v1354 = vld [vmem:[#allocation21] sm:$0xf]
        %v1355 = vld [vmem:[#allocation21 + $0x4] sm:$0xf]
        %v1356 = vld [vmem:[#allocation21 + $0x8] sm:$0xf]
        %v1357 = vld [vmem:[#allocation21 + $0xc] sm:$0xf]
        %v1358 = vld [vmem:[#allocation21 + $0x10] sm:$0xf]
        %v1359 = vld [vmem:[#allocation21 + $0x14] sm:$0xf]
        %v1360 = vld [vmem:[#allocation21 + $0x18] sm:$0xf]
        %v1361 = vld [vmem:[#allocation21 + $0x1c] sm:$0xf]
        %v1362 = vld [vmem:[#allocation21 + $0x20] sm:$0xf]
        %v1363 = vld [vmem:[#allocation21 + $0x24] sm:$0xf]
        %v1364 = vld [vmem:[#allocation21 + $0x28] sm:$0xf]
        %v1365 = vld [vmem:[#allocation21 + $0x2c] sm:$0xf]
        %v1366 = vld [vmem:[#allocation21 + $0x30] sm:$0xf]
        %v1367 = vld [vmem:[#allocation21 + $0x34] sm:$0xf]
        %v1368 = vld [vmem:[#allocation21 + $0x38] sm:$0xf]
        %v1369 = vld [vmem:[#allocation21 + $0x3c] sm:$0xf]
        %v1370 = vld [vmem:[#allocation23] sm:$0x1]
        %v1372 = vlaneseq
        %v1373 = vshrl.u32 %v1372, 7
        %v1374 = vsub.s32 0, %v1373
        %v1375 = vrot.slane %v1370, %v1374
        %v1393 = vunpack.c.l.b16 %v1354
        %v1394 = vunpack.c.l.b16 %v1355
        %v1395 = vunpack.c.l.b16 %v1356
        %v1396 = vunpack.c.l.b16 %v1357
        %v1397 = vunpack.c.l.b16 %v1358
        %v1398 = vunpack.c.l.b16 %v1359
        %v1399 = vunpack.c.l.b16 %v1360
        %v1400 = vunpack.c.l.b16 %v1361
        %v1401 = vunpack.c.l.b16 %v1362
        %v1402 = vunpack.c.l.b16 %v1363
        %v1403 = vunpack.c.l.b16 %v1364
        %v1404 = vunpack.c.l.b16 %v1365
        %v1405 = vunpack.c.l.b16 %v1366
        %v1406 = vunpack.c.l.b16 %v1367
        %v1407 = vunpack.c.l.b16 %v1368
        %v1408 = vunpack.c.l.b16 %v1369
        %v1409 = vpack.c.b16 %v1394, %v1393
        %v1410 = vpack.c.b16 %v1396, %v1395
        %v1411 = vpack.c.b16 %v1398, %v1397
        %v1412 = vpack.c.b16 %v1400, %v1399
        %v1413 = vpack.c.b16 %v1402, %v1401
        %v1414 = vpack.c.b16 %v1404, %v1403
        %v1415 = vpack.c.b16 %v1406, %v1405
        %v1416 = vpack.c.b16 %v1408, %v1407
        %1425 = vmatprep.subr.bf16.mxu0 0
        %1426 = vmatpush1.bf16.msra.mxu0 %v1409
        %1427 = vmatprep.subr.bf16.mxu0 0
        %1428 = vmatpush1.bf16.msra.mxu0 %v1410
        %1429 = vmatprep.subr.bf16.mxu0 0
        %1430 = vmatpush1.bf16.msra.mxu0 %v1411
        %1431 = vmatprep.subr.bf16.mxu0 0
        %1432 = vmatpush1.bf16.msra.mxu0 %v1412
        %1433 = vmatprep.subr.bf16.mxu0 0
        %1434 = vmatpush1.bf16.msra.mxu0 %v1413
        %1435 = vmatprep.subr.bf16.mxu0 0
        %1436 = vmatpush1.bf16.msra.mxu0 %v1414
        %1437 = vmatprep.subr.bf16.mxu0 0
        %1438 = vmatpush1.bf16.msra.mxu0 %v1415
        %1439 = vmatprep.subr.bf16.mxu0 0
        %1440 = vmatpush1.bf16.msra.mxu0 %v1416
        %1441 = vmatprep.subr.bf16.mxu0 0
        %1442 = vmatpush1.bf16.msra.mxu0 0
        %1443 = vmatprep.subr.bf16.mxu0 0
        %1444 = vmatpush1.bf16.msra.mxu0 0
        %1445 = vmatprep.subr.bf16.mxu0 0
        %1446 = vmatpush1.bf16.msra.mxu0 0
        %1447 = vmatprep.subr.bf16.mxu0 0
        %1448 = vmatpush1.bf16.msra.mxu0 0
        %1449 = vmatprep.subr.bf16.mxu0 0
        %1450 = vmatpush1.bf16.msra.mxu0 0
        %1451 = vmatprep.subr.bf16.mxu0 0
        %1452 = vmatpush1.bf16.msra.mxu0 0
        %1453 = vmatprep.subr.bf16.mxu0 0
        %1454 = vmatpush1.bf16.msra.mxu0 0
        %1455 = vmatprep.subr.bf16.mxu0 0
        %1456 = vmatpush1.bf16.msra.mxu0 0
        %1457 = vmatprep.mubr.bf16.mxu0 0
        %1458 = vmatmul.mubr.bf16.gmra.mrb[0].mxu0 %v1353
        %v1459 = vpop.f32.mrb[0].mxu0
        %v1460 = vadd.f32 %v1375, %v1459
        %v1461 = vpop.f32.mrb[0].mxu0
        %v1462 = vpop.f32.mrb[0].mxu0
        %v1463 = vpop.f32.mrb[0].mxu0
        %1464 = vdwg.mxu0
        %v1465 = vadd.f32 %v1247, %v1460
        %1466 = vst.msk [vmem:[%s613] sm:$0xff] %vm616, %v1465
        %s1467 = sand.u32 %s322, 1
        %s1468 = scalar_lea.sflag [#allocation5], %s1467
        %s1469 = sand.u32 %s322, 1
        %s1470 = smul.addr %s1469, 8
        %s1471 = scalar_lea.vmem [#allocation24], %s1470
        // Predicated region
        $region125: #{tpu_custom_call.1} parent=71 // pred_check
          %p1472 = pneg %p332
        $region126: #{tpu_custom_call.1} parent=71 // pred_check_branch
          %1474 = sbr.rel (%p1472) target = $region128
        $region127: #{tpu_custom_call.1} parent=71 // pred_region
          %s1476 = ssub.s32 128, 128
          %1477 = vsyncadd %s1468, %s1476
          %s1478 = smul.addr %s36, 128
          %s1479 = scalar_lea.hbm %s13, %s1478
          %s1481 = sshll.u32 %s1471, 4
          %s1482 = int_to_ptr.vmem [resolvable:$true] %s1481
          %1484 = dma.vmem_to_hbm [thread:$0]  %s1482, 128, %s1479, %s1468
        $region128: #{tpu_custom_call.1} parent=71 // pred_fallthru
          _
      $region72: #{tpu_custom_call.1} parent=5 // pred_fallthru
        _
      %p1485 = scmp.le.s32.totalorder 2, %s31
      // Predicated region
      $region129: #{tpu_custom_call.1} parent=5 // pred_check
        %p1486 = pneg %p1485
      $region130: #{tpu_custom_call.1} parent=5 // pred_check_branch
        %1488 = sbr.rel (%p1486) target = $region132
      $region131: #{tpu_custom_call.1} parent=5 // pred_region
        %s1489 = ssub.s32 %s31, 2
        // Predicated region
        $region133: #{tpu_custom_call.1} parent=131 // pred_check
          %p1490 = pneg %p338
        $region134: #{tpu_custom_call.1} parent=131 // pred_check_branch
          %1492 = sbr.rel (%p1490) target = $region136
        $region135: #{tpu_custom_call.1} parent=131 // pred_region
          %s1493 = sand.u32 %s323, 1
          %s1494 = scalar_lea.sflag [#allocation5], %s1493
          %s1495 = sand.u32 %s323, 1
          %s1496 = smul.addr %s1495, 8
          %s1497 = scalar_lea.vmem [#allocation24], %s1496
          %1498 = dma.done %s1494, 128
        $region136: #{tpu_custom_call.1} parent=131 // pred_fallthru
          _
      $region132: #{tpu_custom_call.1} parent=5 // pred_fallthru
        _
    $region6: #{tpu_custom_call.1} parent=1 // loop_footer
      %s35 = sadd.s32 1, %s31
    $region7: #{tpu_custom_call.1} parent=1 // loop_footer_branch
      %30 = sbr.rel target = $region3
    $region8: #{tpu_custom_call.1} parent=1 // loop_exit
      _
    %1499 = vsyncpa [#allocation4], 1
    %s1500 = scalar_lea.sflag [#allocation4], 1
    %1501 = vsyncpa %s1500, 1
    %1502 = vsyncpa [#allocation7], 1
    %1503 = vsyncpa [#allocation10], 1
    %1504 = vsyncpa [#allocation13], 1
    %1505 = vsyncpa [#allocation16], 1
    %1506 = vsyncpa [#allocation19], 1
    %1507 = vsyncpa [#allocation22], 1
    %1508 = vsyncpa [#allocation5], 1
    %s1509 = scalar_lea.sflag [#allocation5], 1
    %1510 = vsyncpa %s1509, 1

</llo_original>
